<compile_context>
chip_gen: v7x
topology: tpu7x:2x2x1
jax: 0.10.0
libtpu: 0.0.40
codegen_flags: <defaults>
</compile_context>

<pallas_src>
import jax
import jax.numpy as jnp
import numpy as np
from jax.experimental import pallas as pl
from jax.experimental.pallas import tpu as pltpu

# -------------------- miniature CLIP-ViT configuration ---------------------
B = 2              # batch (batch-axis attention below is specialized to B == 2)
C = 3              # image channels (CLIP conv1 expects RGB)
IMG = 16           # image height == width
PATCH = 4          # patch size (stride == kernel size)
NPATCH = (IMG // PATCH) ** 2          # patches per image
L = NPATCH + 1                        # +1 class token (per image)
LPAD = 24                             # per-image token rows padded to 8-multiple
TPAD = B * LPAD                       # fused token rows: [b0 block | b1 block]
D = 32             # transformer width
HEADS = 4
DH = D // HEADS
MLP = 4 * D
LAYERS = 2
EPS = 1e-5         # torch.nn.LayerNorm default eps
CPP = C * PATCH * PATCH
NVEC = 9           # rows in the packed per-layer vector slab
_SCALE = float(DH) ** -0.5


# ------------------------------ fused kernel --------------------------------

def _fused_vit_kernel(patches_ref, wconv_ref, seqinit_ref, hmask_ref,
                      w32_ref, wfc2_ref, vecs_ref, o_ref):
    f32 = jnp.float32
    bf16 = jnp.bfloat16

    hmask = hmask_ref[...]                       # (D, D) per-head block-diag ones (bf16)

    # ---- patch embedding: relu(conv1(x)) as an im2col matmul; cls rows and
    # zero padding rows come pre-positioned in seq_init (pure VPU add).
    emb = jnp.dot(patches_ref[...].astype(bf16), wconv_ref[...],
                  preferred_element_type=f32)
    x = jnp.maximum(emb, 0.0) + seqinit_ref[...]  # (TPAD, D) residual stream (f32)

    def layernorm(t, g, b):
        mu = jnp.mean(t, axis=-1, keepdims=True)
        tc = t - mu
        var = jnp.mean(tc * tc, axis=-1, keepdims=True)
        return tc * jax.lax.rsqrt(var + EPS) * g + b

    def bswap(t):
        # batch 0 <-> batch 1 token-row swap: aligned 24-row sublane-block swap
        # (static slices; XLU/copy work only, no MXU matmul).
        return jnp.concatenate([t[LPAD:, :], t[:LPAD, :]], axis=0)

    for l in range(LAYERS):                       # static unroll (LAYERS == 2)
        w = w32_ref[l]                            # (D, 3D + D + MLP) bf16 weight slab
        wqkv = w[:, :3 * D]                       # (D, 3D)
        wo = w[:, 3 * D:4 * D]                    # (D, D)
        wfc1 = w[:, 4 * D:]                       # (D, MLP)
        vec = vecs_ref[l]                         # (NVEC, MLP) f32 vector slab
        ln1_g = vec[0:1, :D]
        ln1_b = vec[1:2, :D]
        bq = vec[2:3, :D]
        bv = vec[3:4, :D]
        bo = vec[4:5, :D]
        ln2_g = vec[5:6, :D]
        ln2_b = vec[6:7, :D]
        bfc2 = vec[7:8, :D]
        bfc1 = vec[8:9, :]

        # ---- attention; softmax runs over the *batch* axis (B == 2), which is
        # exactly a sigmoid on the logit difference.
        h = layernorm(x, ln1_g, ln1_b)
        qkv = jnp.dot(h.astype(bf16), wqkv, preferred_element_type=f32)   # (T, 3D)
        q = qkv[:, :D] + bq
        k = qkv[:, D:2 * D]                       # k bias cancels in (k - k_swap)
        v = qkv[:, 2 * D:]                        # v bias added once on attn output
        k_sw = bswap(k)
        v_sw = bswap(v)
        # per-(token, head) logit difference, replicated across each head's DH lanes
        dlogit = jnp.dot((q * (k - k_sw)).astype(bf16), hmask,
                         preferred_element_type=f32) * _SCALE
        p = jax.nn.sigmoid(dlogit)                # == softmax over the 2 batch logits (exact)
        attn = v_sw + p * (v - v_sw) + bv         # (T, D), lane dense, pure VPU
        x = x + jnp.dot(attn.astype(bf16), wo, preferred_element_type=f32) + bo

        # ---- MLP: LN2 -> FC1 -> QuickGELU -> FC2 -> residual ----
        h2 = layernorm(x, ln2_g, ln2_b)
        u = jnp.dot(h2.astype(bf16), wfc1, preferred_element_type=f32) + bfc1
        u = u * jax.nn.sigmoid(1.702 * u)         # CLIP QuickGELU (EUP, f32)
        x = x + jnp.dot(u.astype(bf16), wfc2_ref[l], preferred_element_type=f32) + bfc2

    o_ref[...] = x                                # single full store at the end


_N_IN = 7
_VMEM_SPEC = pl.BlockSpec(memory_space=pltpu.MemorySpace.VMEM)


def _fused_call(patches, packed):
    return pl.pallas_call(
        _fused_vit_kernel,
        in_specs=[_VMEM_SPEC] * _N_IN,
        out_specs=_VMEM_SPEC,
        out_shape=jax.ShapeDtypeStruct((TPAD, D), jnp.float32),
    )(patches, *packed)


# ------------------------------- parameters --------------------------------

def init_params(key):
    # TODO(synk): clip.load() pretrained ViT weights / finetune-flag bookkeeping
    # have no in-script equivalent; random weights in the same (torch) layout.
    ks = jax.random.split(key, 2 + LAYERS)

    def nrm(k, shape, std=0.02):
        return (std * jax.random.normal(k, shape)).astype(jnp.float32)

    params = {
        'conv_w': nrm(ks[0], (D, C, PATCH, PATCH)),   # torch Conv2d weight (bias=False)
        'cls': nrm(ks[1], (D,)),                      # visual.class_embedding
        'blocks': [],
    }
    for l in range(LAYERS):
        bk = jax.random.split(ks[2 + l], 12)
        params['blocks'].append({
            'ln1_g': 1.0 + nrm(bk[0], (D,), 0.1),
            'ln1_b': nrm(bk[1], (D,)),
            'w_qkv': nrm(bk[2], (3 * D, D)),          # in_proj_weight
            'b_qkv': nrm(bk[3], (3 * D,)),            # in_proj_bias
            'w_out': nrm(bk[4], (D, D)),              # out_proj.weight
            'b_out': nrm(bk[5], (D,)),
            'ln2_g': 1.0 + nrm(bk[6], (D,), 0.1),
            'ln2_b': nrm(bk[7], (D,)),
            'w_fc1': nrm(bk[8], (MLP, D)),
            'b_fc1': nrm(bk[9], (MLP,)),
            'w_fc2': nrm(bk[10], (D, MLP)),
            'b_fc2': nrm(bk[11], (D,)),
        })
    return params


def pack_params(params):
    """One-time repack (outside jit): transpose / fuse / stack weights into the
    MXU-friendly layouts the fused kernel consumes.

      * wconv            (CPP, D)                bf16
      * seq_init         (TPAD, D)               f32  (cls rows pre-placed, else 0)
      * hmask            (D, D)                  bf16 (per-head block-diag ones)
      * w32 slab         (LAYERS, D, 3D+D+MLP)   bf16 [wq|wk|wv|wo|wfc1]
      * wfc2             (LAYERS, MLP, D)        bf16
      * vec slab         (LAYERS, NVEC, MLP)     f32  [ln1_g,ln1_b,bq,bv,bo,ln2_g,ln2_b,bfc2,bfc1]
    """
    bf16 = jnp.bfloat16
    wconv = jnp.asarray(params['conv_w']).reshape(D, CPP).T.astype(bf16)     # (CPP, D)

    seq_init = np.zeros((TPAD, D), np.float32)
    cls = np.asarray(params['cls'], np.float32)
    for b in range(B):
        seq_init[b * LPAD + NPATCH, :] = cls          # cls row sits after the patches

    hmask = np.zeros((D, D), np.float32)
    for h in range(HEADS):
        hmask[h * DH:(h + 1) * DH, h * DH:(h + 1) * DH] = 1.0

    w32, wfc2, vecs = [], [], []
    for blk in params['blocks']:
        wq = blk['w_qkv'][0 * D:1 * D, :].T           # (D, D)
        wk = blk['w_qkv'][1 * D:2 * D, :].T
        wv = blk['w_qkv'][2 * D:3 * D, :].T
        wo = blk['w_out'].T                           # (D, D)
        wfc1 = blk['w_fc1'].T                         # (D, MLP)
        w32.append(jnp.concatenate([wq, wk, wv, wo, wfc1], axis=1))   # (D, 3D+D+MLP)
        wfc2.append(blk['w_fc2'].T)                   # (MLP, D)

        vrow = np.zeros((NVEC, MLP), np.float32)
        vrow[0, :D] = np.asarray(blk['ln1_g'])
        vrow[1, :D] = np.asarray(blk['ln1_b'])
        vrow[2, :D] = np.asarray(blk['b_qkv'][0 * D:1 * D])   # bq
        vrow[3, :D] = np.asarray(blk['b_qkv'][2 * D:3 * D])   # bv (bk cancels in k - k_swap)
        vrow[4, :D] = np.asarray(blk['b_out'])
        vrow[5, :D] = np.asarray(blk['ln2_g'])
        vrow[6, :D] = np.asarray(blk['ln2_b'])
        vrow[7, :D] = np.asarray(blk['b_fc2'])
        vrow[8, :] = np.asarray(blk['b_fc1'])
        vecs.append(vrow)

    packed = (
        wconv,
        jnp.asarray(seq_init),
        jnp.asarray(hmask).astype(bf16),
        jnp.stack(w32, axis=0).astype(bf16),          # (LAYERS, D, 3D+D+MLP)
        jnp.stack(wfc2, axis=0).astype(bf16),         # (LAYERS, MLP, D)
        jnp.asarray(np.stack(vecs, axis=0)),          # (LAYERS, NVEC, MLP) f32
    )
    assert len(packed) == _N_IN - 1
    return packed


# ------------------------------ forward pass --------------------------------

def clip_vit_forward(packed, x):
    """x: (B, C, H, W) NCHW -> (cls_tokens (B, D), patch_tokens (B, NPATCH, D))."""
    B_, C_, H_, W_ = x.shape
    assert (B_, C_, H_, W_) == (B, C, IMG, IMG), "kernel is specialized to the configured shapes"
    gh, gw = H_ // PATCH, W_ // PATCH
    # im2col for the strided patchify conv + zero-pad each image's token block
    # to LPAD rows (pure layout glue on a tiny array, outside the kernel).
    patches = x.reshape(B_, C_, gh, PATCH, gw, PATCH)
    patches = patches.transpose(0, 2, 4, 1, 3, 5).reshape(B_, gh * gw, CPP)
    patches = jnp.pad(patches, ((0, 0), (0, LPAD - NPATCH), (0, 0)))
    patches = patches.reshape(B_ * LPAD, CPP)                   # (TPAD, CPP)

    out = _fused_call(patches, packed)                          # (TPAD, D)
    out = out.reshape(B, LPAD, D)
    cls_tokens = out[:, NPATCH, :]                              # (B, D)
    patch_tokens = out[:, :NPATCH, :]                           # (B, NPATCH, D)
    return cls_tokens, patch_tokens


# --------------------------- pure-JAX reference -----------------------------

def _reference_forward(params, x):
    hp = jax.lax.Precision.HIGHEST
    B_, C_, H_, W_ = x.shape
    gh, gw = H_ // PATCH, W_ // PATCH
    patches = x.reshape(B_, C_, gh, PATCH, gw, PATCH).transpose(0, 2, 4, 1, 3, 5)
    patches = patches.reshape(B_, gh * gw, C_ * PATCH * PATCH)
    emb = jnp.maximum(
        jnp.einsum('bpk,dk->bpd', patches, params['conv_w'].reshape(D, -1), precision=hp), 0.0)
    cls = jnp.broadcast_to(params['cls'][None, None, :], (B_, 1, D))
    h = jnp.concatenate([cls, emb], axis=1)   # (S=B, N=L, D): MHA sees axis 0 as sequence

    def ln(t, g, b):
        mu = t.mean(-1, keepdims=True)
        var = ((t - mu) ** 2).mean(-1, keepdims=True)
        return (t - mu) / jnp.sqrt(var + EPS) * g + b

    S, N = h.shape[0], h.shape[1]
    for p in params['blocks']:
        y = ln(h, p['ln1_g'], p['ln1_b'])
        qkv = jnp.einsum('snd,ed->sne', y, p['w_qkv'], precision=hp) + p['b_qkv']
        q, k, v = jnp.split(qkv, 3, axis=-1)

        def heads(t):
            return t.reshape(S, N, HEADS, DH).transpose(1, 2, 0, 3)   # (N, H, S, Dh)

        s = jnp.einsum('nhsd,nhtd->nhst', heads(q), heads(k), precision=hp) * (DH ** -0.5)
        a = jax.nn.softmax(s, axis=-1)
        o = jnp.einsum('nhst,nhtd->nhsd', a, heads(v), precision=hp)
        o = o.transpose(2, 0, 1, 3).reshape(S, N, D)
        h = h + jnp.einsum('snd,ed->sne', o, p['w_out'], precision=hp) + p['b_out']
        y2 = ln(h, p['ln2_g'], p['ln2_b'])
        m = jnp.einsum('snd,ed->sne', y2, p['w_fc1'], precision=hp) + p['b_fc1']
        m = m * jax.nn.sigmoid(1.702 * m)
        h = h + jnp.einsum('sne,de->snd', m, p['w_fc2'], precision=hp) + p['b_fc2']
    return h[:, 0, :], h[:, 1:, :]


# ----------------------------------- main ------------------------------------

if __name__ == "__main__":
    key = jax.random.PRNGKey(0)
    pkey, xkey = jax.random.split(key)
    params = init_params(pkey)
    packed = pack_params(params)          # one-time weight repack (outside jit)
    x = jax.random.normal(xkey, (B, C, IMG, IMG), jnp.float32)

    fwd = jax.jit(clip_vit_forward)
    cls_tok, patch_tok = fwd(packed, x)
    jax.block_until_ready((cls_tok, patch_tok))

    assert cls_tok.shape == (B, D)
    assert patch_tok.shape == (B, NPATCH, D)

    cls_ref, patch_ref = _reference_forward(params, x)
    np.testing.assert_allclose(np.asarray(cls_tok), np.asarray(cls_ref), rtol=1e-2, atol=1e-2)
    np.testing.assert_allclose(np.asarray(patch_tok), np.asarray(patch_ref), rtol=1e-2, atol=1e-2)

    print("KERNEL_OK")
</pallas_src>

<mosaic_0001>
module attributes {stable_mosaic.version = 11 : i64} {
  func.func @_fused_vit_kernel(%arg0: memref<48x48xf32, #tpu.memory_space<vmem>>, %arg1: memref<48x32xbf16, #tpu.memory_space<vmem>>, %arg2: memref<48x32xf32, #tpu.memory_space<vmem>>, %arg3: memref<32x32xbf16, #tpu.memory_space<vmem>>, %arg4: memref<2x32x256xbf16, #tpu.memory_space<vmem>>, %arg5: memref<2x128x32xbf16, #tpu.memory_space<vmem>>, %arg6: memref<2x9x128xf32, #tpu.memory_space<vmem>>, %arg7: memref<48x32xf32, #tpu.memory_space<vmem>>) attributes {dimension_semantics = [], scalar_prefetch = 0 : i64, scratch_operands = 0 : i64, tpu.core_type = #tpu.core_type<tc>} {
    %c0 = arith.constant 0 : index
    %c0_0 = arith.constant 0 : index
    %0 = vector.load %arg3[%c0, %c0_0] : memref<32x32xbf16, #tpu.memory_space<vmem>>, vector<32x32xbf16>
    %c0_1 = arith.constant 0 : index
    %c0_2 = arith.constant 0 : index
    %1 = vector.load %arg0[%c0_1, %c0_2] : memref<48x48xf32, #tpu.memory_space<vmem>>, vector<48x48xf32>
    %2 = arith.truncf %1 : vector<48x48xf32> to vector<48x48xbf16>
    %c0_3 = arith.constant 0 : index
    %c0_4 = arith.constant 0 : index
    %3 = vector.load %arg1[%c0_3, %c0_4] : memref<48x32xbf16, #tpu.memory_space<vmem>>, vector<48x32xbf16>
    %cst = arith.constant dense<0.000000e+00> : vector<48x32xf32>
    %4 = tpu.matmul %2, %3, %cst {dimension_numbers = #tpu.dot_dimension_numbers<[1], [0], [0], [1], [0, 0, 1, 1], [], []>} : vector<48x48xbf16>, vector<48x32xbf16>, vector<48x32xf32> -> vector<48x32xf32>
    %cst_5 = arith.constant 0.000000e+00 : f32
    %5 = vector.broadcast %cst_5 : f32 to vector<48x32xf32>
    %6 = arith.maximumf %4, %5 : vector<48x32xf32>
    %c0_6 = arith.constant 0 : index
    %c0_7 = arith.constant 0 : index
    %7 = vector.load %arg2[%c0_6, %c0_7] : memref<48x32xf32, #tpu.memory_space<vmem>>, vector<48x32xf32>
    %8 = arith.addf %6, %7 : vector<48x32xf32>
    %c0_8 = arith.constant 0 : index
    %c0_9 = arith.constant 0 : index
    %c0_10 = arith.constant 0 : index
    %9 = vector.load %arg4[%c0_8, %c0_9, %c0_10] : memref<2x32x256xbf16, #tpu.memory_space<vmem>>, vector<1x32x256xbf16>
    %10 = vector.shape_cast %9 : vector<1x32x256xbf16> to vector<32x256xbf16>
    %11 = vector.extract_strided_slice %10 {offsets = [0, 0], sizes = [32, 96], strides = [1, 1]} : vector<32x256xbf16> to vector<32x96xbf16>
    %12 = vector.extract_strided_slice %10 {offsets = [0, 96], sizes = [32, 32], strides = [1, 1]} : vector<32x256xbf16> to vector<32x32xbf16>
    %13 = vector.extract_strided_slice %10 {offsets = [0, 128], sizes = [32, 128], strides = [1, 1]} : vector<32x256xbf16> to vector<32x128xbf16>
    %c0_11 = arith.constant 0 : index
    %c0_12 = arith.constant 0 : index
    %c0_13 = arith.constant 0 : index
    %14 = vector.load %arg6[%c0_11, %c0_12, %c0_13] : memref<2x9x128xf32, #tpu.memory_space<vmem>>, vector<1x9x128xf32>
    %15 = vector.shape_cast %14 : vector<1x9x128xf32> to vector<9x128xf32>
    %16 = vector.extract_strided_slice %15 {offsets = [0, 0], sizes = [1, 32], strides = [1, 1]} : vector<9x128xf32> to vector<1x32xf32>
    %17 = vector.extract_strided_slice %15 {offsets = [1, 0], sizes = [1, 32], strides = [1, 1]} : vector<9x128xf32> to vector<1x32xf32>
    %18 = vector.extract_strided_slice %15 {offsets = [2, 0], sizes = [1, 32], strides = [1, 1]} : vector<9x128xf32> to vector<1x32xf32>
    %19 = vector.extract_strided_slice %15 {offsets = [3, 0], sizes = [1, 32], strides = [1, 1]} : vector<9x128xf32> to vector<1x32xf32>
    %20 = vector.extract_strided_slice %15 {offsets = [4, 0], sizes = [1, 32], strides = [1, 1]} : vector<9x128xf32> to vector<1x32xf32>
    %21 = vector.extract_strided_slice %15 {offsets = [5, 0], sizes = [1, 32], strides = [1, 1]} : vector<9x128xf32> to vector<1x32xf32>
    %22 = vector.extract_strided_slice %15 {offsets = [6, 0], sizes = [1, 32], strides = [1, 1]} : vector<9x128xf32> to vector<1x32xf32>
    %23 = vector.extract_strided_slice %15 {offsets = [7, 0], sizes = [1, 32], strides = [1, 1]} : vector<9x128xf32> to vector<1x32xf32>
    %24 = vector.extract_strided_slice %15 {offsets = [8, 0], sizes = [1, 128], strides = [1, 1]} : vector<9x128xf32> to vector<1x128xf32>
    %cst_14 = arith.constant dense<0.000000e+00> : vector<48xf32>
    %25 = vector.multi_reduction <add>, %8, %cst_14 [1] : vector<48x32xf32> to vector<48xf32>
    %26 = vector.shape_cast %25 : vector<48xf32> to vector<48x1xf32>
    %cst_15 = arith.constant 3.200000e+01 : f32
    %27 = vector.broadcast %cst_15 : f32 to vector<48x1xf32>
    %28 = arith.divf %26, %27 : vector<48x1xf32>
    %29 = vector.broadcast %28 : vector<48x1xf32> to vector<48x32xf32>
    %30 = arith.subf %8, %29 : vector<48x32xf32>
    %31 = arith.mulf %30, %30 : vector<48x32xf32>
    %cst_16 = arith.constant dense<0.000000e+00> : vector<48xf32>
    %32 = vector.multi_reduction <add>, %31, %cst_16 [1] : vector<48x32xf32> to vector<48xf32>
    %33 = vector.shape_cast %32 : vector<48xf32> to vector<48x1xf32>
    %cst_17 = arith.constant 3.200000e+01 : f32
    %34 = vector.broadcast %cst_17 : f32 to vector<48x1xf32>
    %35 = arith.divf %33, %34 : vector<48x1xf32>
    %cst_18 = arith.constant 9.99999974E-6 : f32
    %36 = vector.broadcast %cst_18 : f32 to vector<48x1xf32>
    %37 = arith.addf %35, %36 : vector<48x1xf32>
    %38 = math.rsqrt %37 : vector<48x1xf32>
    %39 = vector.broadcast %38 : vector<48x1xf32> to vector<48x32xf32>
    %40 = arith.mulf %30, %39 : vector<48x32xf32>
    %41 = vector.broadcast %16 : vector<1x32xf32> to vector<48x32xf32>
    %42 = arith.mulf %40, %41 : vector<48x32xf32>
    %43 = vector.broadcast %17 : vector<1x32xf32> to vector<48x32xf32>
    %44 = arith.addf %42, %43 : vector<48x32xf32>
    %45 = arith.truncf %44 : vector<48x32xf32> to vector<48x32xbf16>
    %cst_19 = arith.constant dense<0.000000e+00> : vector<48x96xf32>
    %46 = tpu.matmul %45, %11, %cst_19 {dimension_numbers = #tpu.dot_dimension_numbers<[1], [0], [0], [1], [0, 0, 1, 1], [], []>} : vector<48x32xbf16>, vector<32x96xbf16>, vector<48x96xf32> -> vector<48x96xf32>
    %47 = vector.extract_strided_slice %46 {offsets = [0, 0], sizes = [48, 32], strides = [1, 1]} : vector<48x96xf32> to vector<48x32xf32>
    %48 = vector.broadcast %18 : vector<1x32xf32> to vector<48x32xf32>
    %49 = arith.addf %47, %48 : vector<48x32xf32>
    %50 = vector.extract_strided_slice %46 {offsets = [0, 32], sizes = [48, 32], strides = [1, 1]} : vector<48x96xf32> to vector<48x32xf32>
    %51 = vector.extract_strided_slice %46 {offsets = [0, 64], sizes = [48, 32], strides = [1, 1]} : vector<48x96xf32> to vector<48x32xf32>
    %52 = vector.extract_strided_slice %50 {offsets = [24, 0], sizes = [24, 32], strides = [1, 1]} : vector<48x32xf32> to vector<24x32xf32>
    %53 = vector.extract_strided_slice %50 {offsets = [0, 0], sizes = [24, 32], strides = [1, 1]} : vector<48x32xf32> to vector<24x32xf32>
    %54 = tpu.concatenate %52, %53 in 0 : vector<24x32xf32>, vector<24x32xf32> -> vector<48x32xf32>
    %55 = vector.extract_strided_slice %51 {offsets = [24, 0], sizes = [24, 32], strides = [1, 1]} : vector<48x32xf32> to vector<24x32xf32>
    %56 = vector.extract_strided_slice %51 {offsets = [0, 0], sizes = [24, 32], strides = [1, 1]} : vector<48x32xf32> to vector<24x32xf32>
    %57 = tpu.concatenate %55, %56 in 0 : vector<24x32xf32>, vector<24x32xf32> -> vector<48x32xf32>
    %58 = arith.subf %50, %54 : vector<48x32xf32>
    %59 = arith.mulf %49, %58 : vector<48x32xf32>
    %60 = arith.truncf %59 : vector<48x32xf32> to vector<48x32xbf16>
    %cst_20 = arith.constant dense<0.000000e+00> : vector<48x32xf32>
    %61 = tpu.matmul %60, %0, %cst_20 {dimension_numbers = #tpu.dot_dimension_numbers<[1], [0], [0], [1], [0, 0, 1, 1], [], []>} : vector<48x32xbf16>, vector<32x32xbf16>, vector<48x32xf32> -> vector<48x32xf32>
    %cst_21 = arith.constant 0.353553385 : f32
    %62 = vector.broadcast %cst_21 : f32 to vector<48x32xf32>
    %63 = arith.mulf %61, %62 : vector<48x32xf32>
    %64 = arith.negf %63 : vector<48x32xf32>
    %65 = math.exp %64 : vector<48x32xf32>
    %cst_22 = arith.constant 1.000000e+00 : f32
    %66 = vector.broadcast %cst_22 : f32 to vector<48x32xf32>
    %67 = arith.addf %66, %65 : vector<48x32xf32>
    %68 = arith.divf %66, %67 : vector<48x32xf32>
    %69 = arith.subf %51, %57 : vector<48x32xf32>
    %70 = arith.mulf %68, %69 : vector<48x32xf32>
    %71 = arith.addf %57, %70 : vector<48x32xf32>
    %72 = vector.broadcast %19 : vector<1x32xf32> to vector<48x32xf32>
    %73 = arith.addf %71, %72 : vector<48x32xf32>
    %74 = arith.truncf %73 : vector<48x32xf32> to vector<48x32xbf16>
    %cst_23 = arith.constant dense<0.000000e+00> : vector<48x32xf32>
    %75 = tpu.matmul %74, %12, %cst_23 {dimension_numbers = #tpu.dot_dimension_numbers<[1], [0], [0], [1], [0, 0, 1, 1], [], []>} : vector<48x32xbf16>, vector<32x32xbf16>, vector<48x32xf32> -> vector<48x32xf32>
    %76 = arith.addf %8, %75 : vector<48x32xf32>
    %77 = vector.broadcast %20 : vector<1x32xf32> to vector<48x32xf32>
    %78 = arith.addf %76, %77 : vector<48x32xf32>
    %cst_24 = arith.constant dense<0.000000e+00> : vector<48xf32>
    %79 = vector.multi_reduction <add>, %78, %cst_24 [1] : vector<48x32xf32> to vector<48xf32>
    %80 = vector.shape_cast %79 : vector<48xf32> to vector<48x1xf32>
    %cst_25 = arith.constant 3.200000e+01 : f32
    %81 = vector.broadcast %cst_25 : f32 to vector<48x1xf32>
    %82 = arith.divf %80, %81 : vector<48x1xf32>
    %83 = vector.broadcast %82 : vector<48x1xf32> to vector<48x32xf32>
    %84 = arith.subf %78, %83 : vector<48x32xf32>
    %85 = arith.mulf %84, %84 : vector<48x32xf32>
    %cst_26 = arith.constant dense<0.000000e+00> : vector<48xf32>
    %86 = vector.multi_reduction <add>, %85, %cst_26 [1] : vector<48x32xf32> to vector<48xf32>
    %87 = vector.shape_cast %86 : vector<48xf32> to vector<48x1xf32>
    %cst_27 = arith.constant 3.200000e+01 : f32
    %88 = vector.broadcast %cst_27 : f32 to vector<48x1xf32>
    %89 = arith.divf %87, %88 : vector<48x1xf32>
    %cst_28 = arith.constant 9.99999974E-6 : f32
    %90 = vector.broadcast %cst_28 : f32 to vector<48x1xf32>
    %91 = arith.addf %89, %90 : vector<48x1xf32>
    %92 = math.rsqrt %91 : vector<48x1xf32>
    %93 = vector.broadcast %92 : vector<48x1xf32> to vector<48x32xf32>
    %94 = arith.mulf %84, %93 : vector<48x32xf32>
    %95 = vector.broadcast %21 : vector<1x32xf32> to vector<48x32xf32>
    %96 = arith.mulf %94, %95 : vector<48x32xf32>
    %97 = vector.broadcast %22 : vector<1x32xf32> to vector<48x32xf32>
    %98 = arith.addf %96, %97 : vector<48x32xf32>
    %99 = arith.truncf %98 : vector<48x32xf32> to vector<48x32xbf16>
    %cst_29 = arith.constant dense<0.000000e+00> : vector<48x128xf32>
    %100 = tpu.matmul %99, %13, %cst_29 {dimension_numbers = #tpu.dot_dimension_numbers<[1], [0], [0], [1], [0, 0, 1, 1], [], []>} : vector<48x32xbf16>, vector<32x128xbf16>, vector<48x128xf32> -> vector<48x128xf32>
    %101 = vector.broadcast %24 : vector<1x128xf32> to vector<48x128xf32>
    %102 = arith.addf %100, %101 : vector<48x128xf32>
    %cst_30 = arith.constant 1.702000e+00 : f32
    %103 = vector.broadcast %cst_30 : f32 to vector<48x128xf32>
    %104 = arith.mulf %103, %102 : vector<48x128xf32>
    %105 = arith.negf %104 : vector<48x128xf32>
    %106 = math.exp %105 : vector<48x128xf32>
    %cst_31 = arith.constant 1.000000e+00 : f32
    %107 = vector.broadcast %cst_31 : f32 to vector<48x128xf32>
    %108 = arith.addf %107, %106 : vector<48x128xf32>
    %109 = arith.divf %107, %108 : vector<48x128xf32>
    %110 = arith.mulf %102, %109 : vector<48x128xf32>
    %111 = arith.truncf %110 : vector<48x128xf32> to vector<48x128xbf16>
    %c0_32 = arith.constant 0 : index
    %c0_33 = arith.constant 0 : index
    %c0_34 = arith.constant 0 : index
    %112 = vector.load %arg5[%c0_32, %c0_33, %c0_34] : memref<2x128x32xbf16, #tpu.memory_space<vmem>>, vector<1x128x32xbf16>
    %113 = vector.shape_cast %112 : vector<1x128x32xbf16> to vector<128x32xbf16>
    %cst_35 = arith.constant dense<0.000000e+00> : vector<48x32xf32>
    %114 = tpu.matmul %111, %113, %cst_35 {dimension_numbers = #tpu.dot_dimension_numbers<[1], [0], [0], [1], [0, 0, 1, 1], [], []>} : vector<48x128xbf16>, vector<128x32xbf16>, vector<48x32xf32> -> vector<48x32xf32>
    %115 = arith.addf %78, %114 : vector<48x32xf32>
    %116 = vector.broadcast %23 : vector<1x32xf32> to vector<48x32xf32>
    %117 = arith.addf %115, %116 : vector<48x32xf32>
    %c1 = arith.constant 1 : index
    %c0_36 = arith.constant 0 : index
    %c0_37 = arith.constant 0 : index
    %118 = vector.load %arg4[%c1, %c0_36, %c0_37] : memref<2x32x256xbf16, #tpu.memory_space<vmem>>, vector<1x32x256xbf16>
    %119 = vector.shape_cast %118 : vector<1x32x256xbf16> to vector<32x256xbf16>
    %120 = vector.extract_strided_slice %119 {offsets = [0, 0], sizes = [32, 96], strides = [1, 1]} : vector<32x256xbf16> to vector<32x96xbf16>
    %121 = vector.extract_strided_slice %119 {offsets = [0, 96], sizes = [32, 32], strides = [1, 1]} : vector<32x256xbf16> to vector<32x32xbf16>
    %122 = vector.extract_strided_slice %119 {offsets = [0, 128], sizes = [32, 128], strides = [1, 1]} : vector<32x256xbf16> to vector<32x128xbf16>
    %c1_38 = arith.constant 1 : index
    %c0_39 = arith.constant 0 : index
    %c0_40 = arith.constant 0 : index
    %123 = vector.load %arg6[%c1_38, %c0_39, %c0_40] : memref<2x9x128xf32, #tpu.memory_space<vmem>>, vector<1x9x128xf32>
    %124 = vector.shape_cast %123 : vector<1x9x128xf32> to vector<9x128xf32>
    %125 = vector.extract_strided_slice %124 {offsets = [0, 0], sizes = [1, 32], strides = [1, 1]} : vector<9x128xf32> to vector<1x32xf32>
    %126 = vector.extract_strided_slice %124 {offsets = [1, 0], sizes = [1, 32], strides = [1, 1]} : vector<9x128xf32> to vector<1x32xf32>
    %127 = vector.extract_strided_slice %124 {offsets = [2, 0], sizes = [1, 32], strides = [1, 1]} : vector<9x128xf32> to vector<1x32xf32>
    %128 = vector.extract_strided_slice %124 {offsets = [3, 0], sizes = [1, 32], strides = [1, 1]} : vector<9x128xf32> to vector<1x32xf32>
    %129 = vector.extract_strided_slice %124 {offsets = [4, 0], sizes = [1, 32], strides = [1, 1]} : vector<9x128xf32> to vector<1x32xf32>
    %130 = vector.extract_strided_slice %124 {offsets = [5, 0], sizes = [1, 32], strides = [1, 1]} : vector<9x128xf32> to vector<1x32xf32>
    %131 = vector.extract_strided_slice %124 {offsets = [6, 0], sizes = [1, 32], strides = [1, 1]} : vector<9x128xf32> to vector<1x32xf32>
    %132 = vector.extract_strided_slice %124 {offsets = [7, 0], sizes = [1, 32], strides = [1, 1]} : vector<9x128xf32> to vector<1x32xf32>
    %133 = vector.extract_strided_slice %124 {offsets = [8, 0], sizes = [1, 128], strides = [1, 1]} : vector<9x128xf32> to vector<1x128xf32>
    %cst_41 = arith.constant dense<0.000000e+00> : vector<48xf32>
    %134 = vector.multi_reduction <add>, %117, %cst_41 [1] : vector<48x32xf32> to vector<48xf32>
    %135 = vector.shape_cast %134 : vector<48xf32> to vector<48x1xf32>
    %cst_42 = arith.constant 3.200000e+01 : f32
    %136 = vector.broadcast %cst_42 : f32 to vector<48x1xf32>
    %137 = arith.divf %135, %136 : vector<48x1xf32>
    %138 = vector.broadcast %137 : vector<48x1xf32> to vector<48x32xf32>
    %139 = arith.subf %117, %138 : vector<48x32xf32>
    %140 = arith.mulf %139, %139 : vector<48x32xf32>
    %cst_43 = arith.constant dense<0.000000e+00> : vector<48xf32>
    %141 = vector.multi_reduction <add>, %140, %cst_43 [1] : vector<48x32xf32> to vector<48xf32>
    %142 = vector.shape_cast %141 : vector<48xf32> to vector<48x1xf32>
    %cst_44 = arith.constant 3.200000e+01 : f32
    %143 = vector.broadcast %cst_44 : f32 to vector<48x1xf32>
    %144 = arith.divf %142, %143 : vector<48x1xf32>
    %cst_45 = arith.constant 9.99999974E-6 : f32
    %145 = vector.broadcast %cst_45 : f32 to vector<48x1xf32>
    %146 = arith.addf %144, %145 : vector<48x1xf32>
    %147 = math.rsqrt %146 : vector<48x1xf32>
    %148 = vector.broadcast %147 : vector<48x1xf32> to vector<48x32xf32>
    %149 = arith.mulf %139, %148 : vector<48x32xf32>
    %150 = vector.broadcast %125 : vector<1x32xf32> to vector<48x32xf32>
    %151 = arith.mulf %149, %150 : vector<48x32xf32>
    %152 = vector.broadcast %126 : vector<1x32xf32> to vector<48x32xf32>
    %153 = arith.addf %151, %152 : vector<48x32xf32>
    %154 = arith.truncf %153 : vector<48x32xf32> to vector<48x32xbf16>
    %cst_46 = arith.constant dense<0.000000e+00> : vector<48x96xf32>
    %155 = tpu.matmul %154, %120, %cst_46 {dimension_numbers = #tpu.dot_dimension_numbers<[1], [0], [0], [1], [0, 0, 1, 1], [], []>} : vector<48x32xbf16>, vector<32x96xbf16>, vector<48x96xf32> -> vector<48x96xf32>
    %156 = vector.extract_strided_slice %155 {offsets = [0, 0], sizes = [48, 32], strides = [1, 1]} : vector<48x96xf32> to vector<48x32xf32>
    %157 = vector.broadcast %127 : vector<1x32xf32> to vector<48x32xf32>
    %158 = arith.addf %156, %157 : vector<48x32xf32>
    %159 = vector.extract_strided_slice %155 {offsets = [0, 32], sizes = [48, 32], strides = [1, 1]} : vector<48x96xf32> to vector<48x32xf32>
    %160 = vector.extract_strided_slice %155 {offsets = [0, 64], sizes = [48, 32], strides = [1, 1]} : vector<48x96xf32> to vector<48x32xf32>
    %161 = vector.extract_strided_slice %159 {offsets = [24, 0], sizes = [24, 32], strides = [1, 1]} : vector<48x32xf32> to vector<24x32xf32>
    %162 = vector.extract_strided_slice %159 {offsets = [0, 0], sizes = [24, 32], strides = [1, 1]} : vector<48x32xf32> to vector<24x32xf32>
    %163 = tpu.concatenate %161, %162 in 0 : vector<24x32xf32>, vector<24x32xf32> -> vector<48x32xf32>
    %164 = vector.extract_strided_slice %160 {offsets = [24, 0], sizes = [24, 32], strides = [1, 1]} : vector<48x32xf32> to vector<24x32xf32>
    %165 = vector.extract_strided_slice %160 {offsets = [0, 0], sizes = [24, 32], strides = [1, 1]} : vector<48x32xf32> to vector<24x32xf32>
    %166 = tpu.concatenate %164, %165 in 0 : vector<24x32xf32>, vector<24x32xf32> -> vector<48x32xf32>
    %167 = arith.subf %159, %163 : vector<48x32xf32>
    %168 = arith.mulf %158, %167 : vector<48x32xf32>
    %169 = arith.truncf %168 : vector<48x32xf32> to vector<48x32xbf16>
    %cst_47 = arith.constant dense<0.000000e+00> : vector<48x32xf32>
    %170 = tpu.matmul %169, %0, %cst_47 {dimension_numbers = #tpu.dot_dimension_numbers<[1], [0], [0], [1], [0, 0, 1, 1], [], []>} : vector<48x32xbf16>, vector<32x32xbf16>, vector<48x32xf32> -> vector<48x32xf32>
    %cst_48 = arith.constant 0.353553385 : f32
    %171 = vector.broadcast %cst_48 : f32 to vector<48x32xf32>
    %172 = arith.mulf %170, %171 : vector<48x32xf32>
    %173 = arith.negf %172 : vector<48x32xf32>
    %174 = math.exp %173 : vector<48x32xf32>
    %cst_49 = arith.constant 1.000000e+00 : f32
    %175 = vector.broadcast %cst_49 : f32 to vector<48x32xf32>
    %176 = arith.addf %175, %174 : vector<48x32xf32>
    %177 = arith.divf %175, %176 : vector<48x32xf32>
    %178 = arith.subf %160, %166 : vector<48x32xf32>
    %179 = arith.mulf %177, %178 : vector<48x32xf32>
    %180 = arith.addf %166, %179 : vector<48x32xf32>
    %181 = vector.broadcast %128 : vector<1x32xf32> to vector<48x32xf32>
    %182 = arith.addf %180, %181 : vector<48x32xf32>
    %183 = arith.truncf %182 : vector<48x32xf32> to vector<48x32xbf16>
    %cst_50 = arith.constant dense<0.000000e+00> : vector<48x32xf32>
    %184 = tpu.matmul %183, %121, %cst_50 {dimension_numbers = #tpu.dot_dimension_numbers<[1], [0], [0], [1], [0, 0, 1, 1], [], []>} : vector<48x32xbf16>, vector<32x32xbf16>, vector<48x32xf32> -> vector<48x32xf32>
    %185 = arith.addf %117, %184 : vector<48x32xf32>
    %186 = vector.broadcast %129 : vector<1x32xf32> to vector<48x32xf32>
    %187 = arith.addf %185, %186 : vector<48x32xf32>
    %cst_51 = arith.constant dense<0.000000e+00> : vector<48xf32>
    %188 = vector.multi_reduction <add>, %187, %cst_51 [1] : vector<48x32xf32> to vector<48xf32>
    %189 = vector.shape_cast %188 : vector<48xf32> to vector<48x1xf32>
    %cst_52 = arith.constant 3.200000e+01 : f32
    %190 = vector.broadcast %cst_52 : f32 to vector<48x1xf32>
    %191 = arith.divf %189, %190 : vector<48x1xf32>
    %192 = vector.broadcast %191 : vector<48x1xf32> to vector<48x32xf32>
    %193 = arith.subf %187, %192 : vector<48x32xf32>
    %194 = arith.mulf %193, %193 : vector<48x32xf32>
    %cst_53 = arith.constant dense<0.000000e+00> : vector<48xf32>
    %195 = vector.multi_reduction <add>, %194, %cst_53 [1] : vector<48x32xf32> to vector<48xf32>
    %196 = vector.shape_cast %195 : vector<48xf32> to vector<48x1xf32>
    %cst_54 = arith.constant 3.200000e+01 : f32
    %197 = vector.broadcast %cst_54 : f32 to vector<48x1xf32>
    %198 = arith.divf %196, %197 : vector<48x1xf32>
    %cst_55 = arith.constant 9.99999974E-6 : f32
    %199 = vector.broadcast %cst_55 : f32 to vector<48x1xf32>
    %200 = arith.addf %198, %199 : vector<48x1xf32>
    %201 = math.rsqrt %200 : vector<48x1xf32>
    %202 = vector.broadcast %201 : vector<48x1xf32> to vector<48x32xf32>
    %203 = arith.mulf %193, %202 : vector<48x32xf32>
    %204 = vector.broadcast %130 : vector<1x32xf32> to vector<48x32xf32>
    %205 = arith.mulf %203, %204 : vector<48x32xf32>
    %206 = vector.broadcast %131 : vector<1x32xf32> to vector<48x32xf32>
    %207 = arith.addf %205, %206 : vector<48x32xf32>
    %208 = arith.truncf %207 : vector<48x32xf32> to vector<48x32xbf16>
    %cst_56 = arith.constant dense<0.000000e+00> : vector<48x128xf32>
    %209 = tpu.matmul %208, %122, %cst_56 {dimension_numbers = #tpu.dot_dimension_numbers<[1], [0], [0], [1], [0, 0, 1, 1], [], []>} : vector<48x32xbf16>, vector<32x128xbf16>, vector<48x128xf32> -> vector<48x128xf32>
    %210 = vector.broadcast %133 : vector<1x128xf32> to vector<48x128xf32>
    %211 = arith.addf %209, %210 : vector<48x128xf32>
    %cst_57 = arith.constant 1.702000e+00 : f32
    %212 = vector.broadcast %cst_57 : f32 to vector<48x128xf32>
    %213 = arith.mulf %212, %211 : vector<48x128xf32>
    %214 = arith.negf %213 : vector<48x128xf32>
    %215 = math.exp %214 : vector<48x128xf32>
    %cst_58 = arith.constant 1.000000e+00 : f32
    %216 = vector.broadcast %cst_58 : f32 to vector<48x128xf32>
    %217 = arith.addf %216, %215 : vector<48x128xf32>
    %218 = arith.divf %216, %217 : vector<48x128xf32>
    %219 = arith.mulf %211, %218 : vector<48x128xf32>
    %220 = arith.truncf %219 : vector<48x128xf32> to vector<48x128xbf16>
    %c1_59 = arith.constant 1 : index
    %c0_60 = arith.constant 0 : index
    %c0_61 = arith.constant 0 : index
    %221 = vector.load %arg5[%c1_59, %c0_60, %c0_61] : memref<2x128x32xbf16, #tpu.memory_space<vmem>>, vector<1x128x32xbf16>
    %222 = vector.shape_cast %221 : vector<1x128x32xbf16> to vector<128x32xbf16>
    %cst_62 = arith.constant dense<0.000000e+00> : vector<48x32xf32>
    %223 = tpu.matmul %220, %222, %cst_62 {dimension_numbers = #tpu.dot_dimension_numbers<[1], [0], [0], [1], [0, 0, 1, 1], [], []>} : vector<48x128xbf16>, vector<128x32xbf16>, vector<48x32xf32> -> vector<48x32xf32>
    %224 = arith.addf %187, %223 : vector<48x32xf32>
    %225 = vector.broadcast %132 : vector<1x32xf32> to vector<48x32xf32>
    %226 = arith.addf %224, %225 : vector<48x32xf32>
    %c0_63 = arith.constant 0 : index
    %c0_64 = arith.constant 0 : index
    %227 = vector.load %arg7[%c0_63, %c0_64] : memref<48x32xf32, #tpu.memory_space<vmem>>, vector<48x32xf32>
    tpu.vector_store %arg7[%c0_63, %c0_64], %226 {strides = array<i32>} : memref<48x32xf32, #tpu.memory_space<vmem>>, vector<48x32xf32>,
    return
  }
}

</mosaic_0001>

<llo_original>
// kernel: clip_vit_forward.1
$region0: #{clip_vit_forward.1}
  #allocation0 [shape = 'u32[]', space=smem, size = 0x4, offset = 0x4, fixed_abs, tag = 'smem constant byte address 0x4 - core index']
  #allocation1 [shape = 'u32[144,128]{1,0:T(1,128)}', space=vmem, size = 0x12000, scoped, tag = 'internal scratch']
  %s0 = inlined_call_operand.vmem [shape: f32[48,48], index: 0, kind: input, shape index: {}]
  %s1 = inlined_call_operand.vmem [shape: bf16[48,32], index: 1, kind: input, shape index: {}]
  %s2 = inlined_call_operand.vmem [shape: f32[48,32], index: 2, kind: input, shape index: {}]
  %s3 = inlined_call_operand.vmem [shape: bf16[32,32], index: 3, kind: input, shape index: {}]
  %s4 = inlined_call_operand.vmem [shape: bf16[2,32,256], index: 4, kind: input, shape index: {}]
  %s5 = inlined_call_operand.vmem [shape: bf16[2,128,32], index: 5, kind: input, shape index: {}]
  %s6 = inlined_call_operand.vmem [shape: f32[2,9,128], index: 6, kind: input, shape index: {}]
  %s7 = inlined_call_operand.vmem [shape: f32[48,32], index: 7, kind: output, shape index: {}]
  %s8 = sld [smem:[#allocation0]]
  $region38: #{clip_vit_forward.1} parent=0
    _
  %s10 = ssub.s32 1, %s8
  %s11 = scalar_select 0, %s10, %s8
  // Predicated region
  $region2: #{clip_vit_forward.1} parent=0 // pred_check
    _
  $region3: #{clip_vit_forward.1} parent=0 // pred_check_branch
    %13 = sbr.rel (0) target = $region5
  $region4: #{clip_vit_forward.1} parent=0 // pred_region
    _
  $region5: #{clip_vit_forward.1} parent=0 // pred_fallthru
    _
  // Predicated region
  $region6: #{clip_vit_forward.1} parent=0 // pred_check
    _
  $region7: #{clip_vit_forward.1} parent=0 // pred_check_branch
    %15 = sbr.rel (0) target = $region9
  $region8: #{clip_vit_forward.1} parent=0 // pred_region
    _
  $region9: #{clip_vit_forward.1} parent=0 // pred_fallthru
    _
  // Predicated region
  $region10: #{clip_vit_forward.1} parent=0 // pred_check
    _
  $region11: #{clip_vit_forward.1} parent=0 // pred_check_branch
    %17 = sbr.rel (0) target = $region13
  $region12: #{clip_vit_forward.1} parent=0 // pred_region
    _
  $region13: #{clip_vit_forward.1} parent=0 // pred_fallthru
    _
  // Predicated region
  $region14: #{clip_vit_forward.1} parent=0 // pred_check
    _
  $region15: #{clip_vit_forward.1} parent=0 // pred_check_branch
    %19 = sbr.rel (0) target = $region17
  $region16: #{clip_vit_forward.1} parent=0 // pred_region
    _
  $region17: #{clip_vit_forward.1} parent=0 // pred_fallthru
    _
  // Predicated region
  $region18: #{clip_vit_forward.1} parent=0 // pred_check
    _
  $region19: #{clip_vit_forward.1} parent=0 // pred_check_branch
    %21 = sbr.rel (0) target = $region21
  $region20: #{clip_vit_forward.1} parent=0 // pred_region
    _
  $region21: #{clip_vit_forward.1} parent=0 // pred_fallthru
    _
  // Predicated region
  $region22: #{clip_vit_forward.1} parent=0 // pred_check
    _
  $region23: #{clip_vit_forward.1} parent=0 // pred_check_branch
    %23 = sbr.rel (0) target = $region25
  $region24: #{clip_vit_forward.1} parent=0 // pred_region
    _
  $region25: #{clip_vit_forward.1} parent=0 // pred_fallthru
    _
  // Predicated region
  $region26: #{clip_vit_forward.1} parent=0 // pred_check
    _
  $region27: #{clip_vit_forward.1} parent=0 // pred_check_branch
    %25 = sbr.rel (0) target = $region29
  $region28: #{clip_vit_forward.1} parent=0 // pred_region
    _
  $region29: #{clip_vit_forward.1} parent=0 // pred_fallthru
    _
  %v27 = vld [vmem:[%s3] sm:$0xf]
  %v28 = vld [vmem:[%s3 + $0x4] sm:$0xf]
  %v29 = vld [vmem:[%s3 + $0x8] sm:$0xf]
  %v30 = vld [vmem:[%s3 + $0xc] sm:$0xf]
  %v31 = vld [vmem:[%s0] sm:$0xff]
  %v32 = vld [vmem:[%s0 + $0x8] sm:$0xff]
  %v33 = vld [vmem:[%s0 + $0x10] sm:$0xff]
  %v34 = vld [vmem:[%s0 + $0x18] sm:$0xff]
  %v35 = vld [vmem:[%s0 + $0x20] sm:$0xff]
  %v36 = vld [vmem:[%s0 + $0x28] sm:$0xff]
  %v37 = vpack.c.bf16 %v32, %v31
  %v38 = vpack.c.bf16 %v34, %v33
  %v39 = vpack.c.bf16 %v36, %v35
  %v40 = vld [vmem:[%s1] sm:$0xf]
  %v41 = vld [vmem:[%s1 + $0x4] sm:$0xf]
  %v42 = vld [vmem:[%s1 + $0x8] sm:$0xf]
  %v43 = vld [vmem:[%s1 + $0xc] sm:$0xf]
  %v44 = vld [vmem:[%s1 + $0x10] sm:$0xf]
  %v45 = vld [vmem:[%s1 + $0x14] sm:$0xf]
  %v52 = vunpack.c.l.b16 %v40
  %v53 = vunpack.c.l.b16 %v41
  %v54 = vunpack.c.l.b16 %v42
  %v55 = vunpack.c.l.b16 %v43
  %v56 = vunpack.c.l.b16 %v44
  %v57 = vunpack.c.l.b16 %v45
  %v58 = vpack.c.b16 %v53, %v52
  %v59 = vpack.c.b16 %v55, %v54
  %v60 = vpack.c.b16 %v57, %v56
  %vm64 = vcmask 392192
  %v66 = vsel %vm64, %v37, 0
  %v69 = vsel %vm64, %v38, 0
  %v72 = vsel %vm64, %v39, 0
  %74 = vmatprep.subr.bf16.mxu0 0
  %75 = vmatpush1.bf16.msra.mxu0 %v58
  %76 = vmatprep.subr.bf16.mxu0 0
  %77 = vmatpush1.bf16.msra.mxu0 %v59
  %78 = vmatprep.subr.bf16.mxu0 0
  %79 = vmatpush1.bf16.msra.mxu0 %v60
  %80 = vmatprep.subr.bf16.mxu0 0
  %81 = vmatpush1.bf16.msra.mxu0 0
  %82 = vmatprep.subr.bf16.mxu0 0
  %83 = vmatpush1.bf16.msra.mxu0 0
  %84 = vmatprep.subr.bf16.mxu0 0
  %85 = vmatpush1.bf16.msra.mxu0 0
  %86 = vmatprep.subr.bf16.mxu0 0
  %87 = vmatpush1.bf16.msra.mxu0 0
  %88 = vmatprep.subr.bf16.mxu0 0
  %89 = vmatpush1.bf16.msra.mxu0 0
  %90 = vmatprep.subr.bf16.mxu0 0
  %91 = vmatpush1.bf16.msra.mxu0 0
  %92 = vmatprep.subr.bf16.mxu0 0
  %93 = vmatpush1.bf16.msra.mxu0 0
  %94 = vmatprep.subr.bf16.mxu0 0
  %95 = vmatpush1.bf16.msra.mxu0 0
  %96 = vmatprep.subr.bf16.mxu0 0
  %97 = vmatpush1.bf16.msra.mxu0 0
  %98 = vmatprep.subr.bf16.mxu0 0
  %99 = vmatpush1.bf16.msra.mxu0 0
  %100 = vmatprep.subr.bf16.mxu0 0
  %101 = vmatpush1.bf16.msra.mxu0 0
  %102 = vmatprep.subr.bf16.mxu0 0
  %103 = vmatpush1.bf16.msra.mxu0 0
  %104 = vmatprep.subr.bf16.mxu0 0
  %105 = vmatpush1.bf16.msra.mxu0 0
  %106 = vmatprep.mubr.bf16.mxu0 0
  %107 = vmatmul.mubr.bf16.gmra.mrb[0].mxu0 %v66
  %v108 = vpop.f32.mrb[0].mxu0
  %v109 = vadd.f32 0.0, %v108
  %v110 = vpop.f32.mrb[0].mxu0
  %v111 = vpop.f32.mrb[0].mxu0
  %v112 = vadd.f32 0.0, %v111
  %v113 = vpop.f32.mrb[0].mxu0
  %114 = vmatprep.mubr.bf16.mxu0 0
  %115 = vmatmul.mubr.bf16.gmra.mrb[0].mxu0 %v69
  %v116 = vpop.f32.mrb[0].mxu0
  %v117 = vadd.f32 0.0, %v116
  %v118 = vpop.f32.mrb[0].mxu0
  %v119 = vpop.f32.mrb[0].mxu0
  %v120 = vadd.f32 0.0, %v119
  %v121 = vpop.f32.mrb[0].mxu0
  %122 = vmatprep.mubr.bf16.mxu0 0
  %123 = vmatmul.mubr.bf16.gmra.mrb[0].mxu0 %v72
  %v124 = vpop.f32.mrb[0].mxu0
  %v125 = vadd.f32 0.0, %v124
  %v126 = vpop.f32.mrb[0].mxu0
  %v127 = vpop.f32.mrb[0].mxu0
  %v128 = vadd.f32 0.0, %v127
  %v129 = vpop.f32.mrb[0].mxu0
  %130 = vdwg.mxu0
  %v131 = vmax.f32 %v109, 0.0
  %v132 = vmax.f32 %v112, 0.0
  %v133 = vmax.f32 %v117, 0.0
  %v134 = vmax.f32 %v120, 0.0
  %v135 = vmax.f32 %v125, 0.0
  %v136 = vmax.f32 %v128, 0.0
  %v137 = vld [vmem:[%s2] sm:$0xff]
  %v138 = vld [vmem:[%s2 + $0x8] sm:$0xff]
  %v139 = vld [vmem:[%s2 + $0x10] sm:$0xff]
  %v140 = vld [vmem:[%s2 + $0x18] sm:$0xff]
  %v141 = vld [vmem:[%s2 + $0x20] sm:$0xff]
  %v142 = vld [vmem:[%s2 + $0x28] sm:$0xff]
  %v143 = vadd.f32 %v131, %v137
  %v144 = vadd.f32 %v132, %v138
  %v145 = vadd.f32 %v133, %v139
  %v146 = vadd.f32 %v134, %v140
  %v147 = vadd.f32 %v135, %v141
  %v148 = vadd.f32 %v136, %v142
  %v149 = vld [vmem:[%s4] sm:$0xff]
  %v150 = vld [vmem:[%s4 + $0x8] sm:$0xff]
  %v151 = vld [vmem:[%s4 + $0x10] sm:$0xff]
  %v152 = vld [vmem:[%s4 + $0x18] sm:$0xff]
  %v153 = vld [vmem:[%s6] sm:$0xff]
  %v154 = vld [vmem:[%s6 + $0x8] sm:$0x1]
  %vm155 = vcmask 261120
  %v156 = vsel %vm155, %v143, 0.0
  %157 = vadd.xlane.f32.xlu0 %v156
  %v158 = vpop.xlane.xlu0 %157
  %v159 = vsel %vm155, %v144, 0.0
  %160 = vadd.xlane.f32.xlu0 %v159
  %v161 = vpop.xlane.xlu0 %160
  %v162 = vsel %vm155, %v145, 0.0
  %163 = vadd.xlane.f32.xlu0 %v162
  %v164 = vpop.xlane.xlu0 %163
  %v165 = vsel %vm155, %v146, 0.0
  %166 = vadd.xlane.f32.xlu0 %v165
  %v167 = vpop.xlane.xlu0 %166
  %v168 = vsel %vm155, %v147, 0.0
  %169 = vadd.xlane.f32.xlu0 %v168
  %v170 = vpop.xlane.xlu0 %169
  %v171 = vsel %vm155, %v148, 0.0
  %172 = vadd.xlane.f32.xlu0 %v171
  %v173 = vpop.xlane.xlu0 %172
  %v174 = vrcp.pop 32.0
  %v175 = vmul.f32 %v158, %v174
  %v176 = vmul.f32 %v161, %v174
  %v177 = vmul.f32 %v164, %v174
  %v178 = vmul.f32 %v167, %v174
  %v179 = vmul.f32 %v170, %v174
  %v180 = vmul.f32 %v173, %v174
  %v181 = vsub.f32 %v143, %v175
  %v182 = vsub.f32 %v144, %v176
  %v183 = vsub.f32 %v145, %v177
  %v184 = vsub.f32 %v146, %v178
  %v185 = vsub.f32 %v147, %v179
  %v186 = vsub.f32 %v148, %v180
  %v187 = vmul.f32 %v181, %v181
  %v188 = vmul.f32 %v182, %v182
  %v189 = vmul.f32 %v183, %v183
  %v190 = vmul.f32 %v184, %v184
  %v191 = vmul.f32 %v185, %v185
  %v192 = vmul.f32 %v186, %v186
  %v193 = vsel %vm155, %v187, 0.0
  %194 = vadd.xlane.f32.xlu0 %v193
  %v195 = vpop.xlane.xlu0 %194
  %v196 = vsel %vm155, %v188, 0.0
  %197 = vadd.xlane.f32.xlu0 %v196
  %v198 = vpop.xlane.xlu0 %197
  %v199 = vsel %vm155, %v189, 0.0
  %200 = vadd.xlane.f32.xlu0 %v199
  %v201 = vpop.xlane.xlu0 %200
  %v202 = vsel %vm155, %v190, 0.0
  %203 = vadd.xlane.f32.xlu0 %v202
  %v204 = vpop.xlane.xlu0 %203
  %v205 = vsel %vm155, %v191, 0.0
  %206 = vadd.xlane.f32.xlu0 %v205
  %v207 = vpop.xlane.xlu0 %206
  %v208 = vsel %vm155, %v192, 0.0
  %209 = vadd.xlane.f32.xlu0 %v208
  %v210 = vpop.xlane.xlu0 %209
  %v211 = vmul.f32 %v195, %v174
  %v212 = vmul.f32 %v198, %v174
  %v213 = vmul.f32 %v201, %v174
  %v214 = vmul.f32 %v204, %v174
  %v215 = vmul.f32 %v207, %v174
  %v216 = vmul.f32 %v210, %v174
  %v217 = vadd.f32 %v211, 1e-05
  %v218 = vadd.f32 %v212, 1e-05
  %v219 = vadd.f32 %v213, 1e-05
  %v220 = vadd.f32 %v214, 1e-05
  %v221 = vadd.f32 %v215, 1e-05
  %v222 = vadd.f32 %v216, 1e-05
  %v223 = vrsqrt.pop %v217
  %v224 = vrsqrt.pop %v218
  %v225 = vrsqrt.pop %v219
  %v226 = vrsqrt.pop %v220
  %v227 = vrsqrt.pop %v221
  %v228 = vrsqrt.pop %v222
  %v229 = vmul.f32 %v181, %v223
  %v230 = vmul.f32 %v182, %v224
  %v231 = vmul.f32 %v183, %v225
  %v232 = vmul.f32 %v184, %v226
  %v233 = vmul.f32 %v185, %v227
  %v234 = vmul.f32 %v186, %v228
  %v235 = vlaneseq
  %v236 = vshrl.u32 %v235, 7
  %v237 = vsub.s32 0, %v236
  %v238 = vrot.slane %v153, %v237
  %v239 = vmul.f32 %v229, %v238
  %v240 = vmul.f32 %v230, %v238
  %v241 = vmul.f32 %v231, %v238
  %v242 = vmul.f32 %v232, %v238
  %v243 = vmul.f32 %v233, %v238
  %v244 = vmul.f32 %v234, %v238
  %v245 = vlaneseq
  %v246 = vshrl.u32 %v245, 7
  %v247 = vsub.s32 1, %v246
  %v248 = vrot.slane %v153, %v247
  %v249 = vadd.f32 %v239, %v248
  %v250 = vadd.f32 %v240, %v248
  %v251 = vadd.f32 %v241, %v248
  %v252 = vadd.f32 %v242, %v248
  %v253 = vadd.f32 %v243, %v248
  %v254 = vadd.f32 %v244, %v248
  %v255 = vpack.c.bf16 %v250, %v249
  %v256 = vpack.c.bf16 %v252, %v251
  %v257 = vpack.c.bf16 %v254, %v253
  %v262 = vunpack.c.l.b16 %v149
  %v263 = vunpack.c.l.b16 %v150
  %v264 = vunpack.c.l.b16 %v151
  %v265 = vunpack.c.l.b16 %v152
  %v266 = vpack.c.b16 %v263, %v262
  %v267 = vpack.c.b16 %v265, %v264
  %v271 = vsel %vm155, %v255, 0
  %v274 = vsel %vm155, %v256, 0
  %v277 = vsel %vm155, %v257, 0
  %279 = vmatprep.subr.bf16.mxu0 0
  %280 = vmatpush1.bf16.msra.mxu0 %v266
  %281 = vmatprep.subr.bf16.mxu0 0
  %282 = vmatpush1.bf16.msra.mxu0 %v267
  %283 = vmatprep.subr.bf16.mxu0 0
  %284 = vmatpush1.bf16.msra.mxu0 0
  %285 = vmatprep.subr.bf16.mxu0 0
  %286 = vmatpush1.bf16.msra.mxu0 0
  %287 = vmatprep.subr.bf16.mxu0 0
  %288 = vmatpush1.bf16.msra.mxu0 0
  %289 = vmatprep.subr.bf16.mxu0 0
  %290 = vmatpush1.bf16.msra.mxu0 0
  %291 = vmatprep.subr.bf16.mxu0 0
  %292 = vmatpush1.bf16.msra.mxu0 0
  %293 = vmatprep.subr.bf16.mxu0 0
  %294 = vmatpush1.bf16.msra.mxu0 0
  %295 = vmatprep.subr.bf16.mxu0 0
  %296 = vmatpush1.bf16.msra.mxu0 0
  %297 = vmatprep.subr.bf16.mxu0 0
  %298 = vmatpush1.bf16.msra.mxu0 0
  %299 = vmatprep.subr.bf16.mxu0 0
  %300 = vmatpush1.bf16.msra.mxu0 0
  %301 = vmatprep.subr.bf16.mxu0 0
  %302 = vmatpush1.bf16.msra.mxu0 0
  %303 = vmatprep.subr.bf16.mxu0 0
  %304 = vmatpush1.bf16.msra.mxu0 0
  %305 = vmatprep.subr.bf16.mxu0 0
  %306 = vmatpush1.bf16.msra.mxu0 0
  %307 = vmatprep.subr.bf16.mxu0 0
  %308 = vmatpush1.bf16.msra.mxu0 0
  %309 = vmatprep.subr.bf16.mxu0 0
  %310 = vmatpush1.bf16.msra.mxu0 0
  %311 = vmatprep.mubr.bf16.mxu0 0
  %312 = vmatmul.mubr.bf16.gmra.mrb[0].mxu0 %v271
  %v313 = vpop.f32.mrb[0].mxu0
  %v314 = vadd.f32 0.0, %v313
  %v315 = vpop.f32.mrb[0].mxu0
  %v316 = vpop.f32.mrb[0].mxu0
  %v317 = vadd.f32 0.0, %v316
  %v318 = vpop.f32.mrb[0].mxu0
  %319 = vmatprep.mubr.bf16.mxu0 0
  %320 = vmatmul.mubr.bf16.gmra.mrb[0].mxu0 %v274
  %v321 = vpop.f32.mrb[0].mxu0
  %v322 = vadd.f32 0.0, %v321
  %v323 = vpop.f32.mrb[0].mxu0
  %v324 = vpop.f32.mrb[0].mxu0
  %v325 = vadd.f32 0.0, %v324
  %v326 = vpop.f32.mrb[0].mxu0
  %327 = vmatprep.mubr.bf16.mxu0 0
  %328 = vmatmul.mubr.bf16.gmra.mrb[0].mxu0 %v277
  %v329 = vpop.f32.mrb[0].mxu0
  %v330 = vadd.f32 0.0, %v329
  %v331 = vpop.f32.mrb[0].mxu0
  %v332 = vpop.f32.mrb[0].mxu0
  %v333 = vadd.f32 0.0, %v332
  %v334 = vpop.f32.mrb[0].mxu0
  %335 = vdwg.mxu0
  %v336 = vlaneseq
  %v337 = vshrl.u32 %v336, 7
  %v338 = vsub.s32 2, %v337
  %v339 = vrot.slane %v153, %v338
  %v340 = vadd.f32 %v314, %v339
  %v341 = vadd.f32 %v317, %v339
  %v342 = vadd.f32 %v322, %v339
  %v343 = vadd.f32 %v325, %v339
  %v344 = vadd.f32 %v330, %v339
  %v345 = vadd.f32 %v333, %v339
  %v346 = vsub.f32 %v314, %v325
  %v347 = vsub.f32 %v317, %v330
  %v348 = vsub.f32 %v322, %v333
  %v349 = vsub.f32 %v325, %v314
  %v350 = vsub.f32 %v330, %v317
  %v351 = vsub.f32 %v333, %v322
  %358 = vrot.lane.b32.xlu0 %v346, 96
  %v359 = vpop.permute.xlu0 %358
  %360 = vrot.lane.b32.xlu0 %v347, 96
  %v361 = vpop.permute.xlu0 %360
  %362 = vrot.lane.b32.xlu0 %v348, 96
  %v363 = vpop.permute.xlu0 %362
  %364 = vrot.lane.b32.xlu0 %v349, 96
  %v365 = vpop.permute.xlu0 %364
  %366 = vrot.lane.b32.xlu0 %v350, 96
  %v367 = vpop.permute.xlu0 %366
  %368 = vrot.lane.b32.xlu0 %v351, 96
  %v369 = vpop.permute.xlu0 %368
  %v376 = vmul.f32 %v340, %v359
  %v377 = vmul.f32 %v341, %v361
  %v378 = vmul.f32 %v342, %v363
  %v379 = vmul.f32 %v343, %v365
  %v380 = vmul.f32 %v344, %v367
  %v381 = vmul.f32 %v345, %v369
  %v382 = vpack.c.bf16 %v377, %v376
  %v383 = vpack.c.bf16 %v379, %v378
  %v384 = vpack.c.bf16 %v381, %v380
  %v389 = vunpack.c.l.b16 %v27
  %v390 = vunpack.c.l.b16 %v28
  %v391 = vunpack.c.l.b16 %v29
  %v392 = vunpack.c.l.b16 %v30
  %v393 = vpack.c.b16 %v390, %v389
  %v394 = vpack.c.b16 %v392, %v391
  %v398 = vsel %vm155, %v382, 0
  %v401 = vsel %vm155, %v383, 0
  %v404 = vsel %vm155, %v384, 0
  %406 = vmatprep.subr.bf16.mxu0 0
  %407 = vmatpush1.bf16.msra.mxu0 %v393
  %408 = vmatprep.subr.bf16.mxu0 0
  %409 = vmatpush1.bf16.msra.mxu0 %v394
  %410 = vmatprep.subr.bf16.mxu0 0
  %411 = vmatpush1.bf16.msra.mxu0 0
  %412 = vmatprep.subr.bf16.mxu0 0
  %413 = vmatpush1.bf16.msra.mxu0 0
  %414 = vmatprep.subr.bf16.mxu0 0
  %415 = vmatpush1.bf16.msra.mxu0 0
  %416 = vmatprep.subr.bf16.mxu0 0
  %417 = vmatpush1.bf16.msra.mxu0 0
  %418 = vmatprep.subr.bf16.mxu0 0
  %419 = vmatpush1.bf16.msra.mxu0 0
  %420 = vmatprep.subr.bf16.mxu0 0
  %421 = vmatpush1.bf16.msra.mxu0 0
  %422 = vmatprep.subr.bf16.mxu0 0
  %423 = vmatpush1.bf16.msra.mxu0 0
  %424 = vmatprep.subr.bf16.mxu0 0
  %425 = vmatpush1.bf16.msra.mxu0 0
  %426 = vmatprep.subr.bf16.mxu0 0
  %427 = vmatpush1.bf16.msra.mxu0 0
  %428 = vmatprep.subr.bf16.mxu0 0
  %429 = vmatpush1.bf16.msra.mxu0 0
  %430 = vmatprep.subr.bf16.mxu0 0
  %431 = vmatpush1.bf16.msra.mxu0 0
  %432 = vmatprep.subr.bf16.mxu0 0
  %433 = vmatpush1.bf16.msra.mxu0 0
  %434 = vmatprep.subr.bf16.mxu0 0
  %435 = vmatpush1.bf16.msra.mxu0 0
  %436 = vmatprep.subr.bf16.mxu0 0
  %437 = vmatpush1.bf16.msra.mxu0 0
  %438 = vmatprep.mubr.bf16.mxu0 0
  %439 = vmatmul.mubr.bf16.gmra.mrb[0].mxu0 %v398
  %v440 = vpop.f32.mrb[0].mxu0
  %v441 = vadd.f32 0.0, %v440
  %v442 = vpop.f32.mrb[0].mxu0
  %v443 = vpop.f32.mrb[0].mxu0
  %v444 = vadd.f32 0.0, %v443
  %v445 = vpop.f32.mrb[0].mxu0
  %446 = vmatprep.mubr.bf16.mxu0 0
  %447 = vmatmul.mubr.bf16.gmra.mrb[0].mxu0 %v401
  %v448 = vpop.f32.mrb[0].mxu0
  %v449 = vadd.f32 0.0, %v448
  %v450 = vpop.f32.mrb[0].mxu0
  %v451 = vpop.f32.mrb[0].mxu0
  %v452 = vadd.f32 0.0, %v451
  %v453 = vpop.f32.mrb[0].mxu0
  %454 = vmatprep.mubr.bf16.mxu0 0
  %455 = vmatmul.mubr.bf16.gmra.mrb[0].mxu0 %v404
  %v456 = vpop.f32.mrb[0].mxu0
  %v457 = vadd.f32 0.0, %v456
  %v458 = vpop.f32.mrb[0].mxu0
  %v459 = vpop.f32.mrb[0].mxu0
  %v460 = vadd.f32 0.0, %v459
  %v461 = vpop.f32.mrb[0].mxu0
  %462 = vdwg.mxu0
  %v463 = vmul.f32 %v441, 0.35355338
  %v464 = vmul.f32 %v444, 0.35355338
  %v465 = vmul.f32 %v449, 0.35355338
  %v466 = vmul.f32 %v452, 0.35355338
  %v467 = vmul.f32 %v457, 0.35355338
  %v468 = vmul.f32 %v460, 0.35355338
  %v469 = vxor.u32 %v463, 2147483648
  %v470 = vxor.u32 %v464, 2147483648
  %v471 = vxor.u32 %v465, 2147483648
  %v472 = vxor.u32 %v466, 2147483648
  %v473 = vxor.u32 %v467, 2147483648
  %v474 = vxor.u32 %v468, 2147483648
  %v475 = vmul.f32 %v469, 1.442695
  %v476 = vpow.pop %v475
  %v477 = vmul.f32 %v470, 1.442695
  %v478 = vpow.pop %v477
  %v479 = vmul.f32 %v471, 1.442695
  %v480 = vpow.pop %v479
  %v481 = vmul.f32 %v472, 1.442695
  %v482 = vpow.pop %v481
  %v483 = vmul.f32 %v473, 1.442695
  %v484 = vpow.pop %v483
  %v485 = vmul.f32 %v474, 1.442695
  %v486 = vpow.pop %v485
  %v487 = vadd.f32 %v476, 1.0
  %v488 = vadd.f32 %v478, 1.0
  %v489 = vadd.f32 %v480, 1.0
  %v490 = vadd.f32 %v482, 1.0
  %v491 = vadd.f32 %v484, 1.0
  %v492 = vadd.f32 %v486, 1.0
  %v493 = vrcp.pop %v487
  %v494 = vmul.f32 1.0, %v493
  %v495 = vrcp.pop %v488
  %v496 = vmul.f32 1.0, %v495
  %v497 = vrcp.pop %v489
  %v498 = vmul.f32 1.0, %v497
  %v499 = vrcp.pop %v490
  %v500 = vmul.f32 1.0, %v499
  %v501 = vrcp.pop %v491
  %v502 = vmul.f32 1.0, %v501
  %v503 = vrcp.pop %v492
  %v504 = vmul.f32 1.0, %v503
  %505 = vrot.lane.b32.xlu0 %v346, 64
  %v506 = vpop.permute.xlu0 %505
  %507 = vrot.lane.b32.xlu0 %v347, 64
  %v508 = vpop.permute.xlu0 %507
  %509 = vrot.lane.b32.xlu0 %v348, 64
  %v510 = vpop.permute.xlu0 %509
  %511 = vrot.lane.b32.xlu0 %v349, 64
  %v512 = vpop.permute.xlu0 %511
  %513 = vrot.lane.b32.xlu0 %v350, 64
  %v514 = vpop.permute.xlu0 %513
  %515 = vrot.lane.b32.xlu0 %v351, 64
  %v516 = vpop.permute.xlu0 %515
  %v523 = vmul.f32 %v494, %v506
  %v524 = vmul.f32 %v496, %v508
  %v525 = vmul.f32 %v498, %v510
  %v526 = vmul.f32 %v500, %v512
  %v527 = vmul.f32 %v502, %v514
  %v528 = vmul.f32 %v504, %v516
  %535 = vrot.lane.b32.xlu0 %v523, 64
  %v536 = vpop.permute.xlu0 %535
  %537 = vrot.lane.b32.xlu0 %v524, 64
  %v538 = vpop.permute.xlu0 %537
  %539 = vrot.lane.b32.xlu0 %v525, 64
  %v540 = vpop.permute.xlu0 %539
  %541 = vrot.lane.b32.xlu0 %v526, 64
  %v542 = vpop.permute.xlu0 %541
  %543 = vrot.lane.b32.xlu0 %v527, 64
  %v544 = vpop.permute.xlu0 %543
  %545 = vrot.lane.b32.xlu0 %v528, 64
  %v546 = vpop.permute.xlu0 %545
  %v553 = vadd.f32 %v325, %v536
  %v554 = vadd.f32 %v330, %v538
  %v555 = vadd.f32 %v333, %v540
  %v556 = vadd.f32 %v314, %v542
  %v557 = vadd.f32 %v317, %v544
  %v558 = vadd.f32 %v322, %v546
  %v559 = vlaneseq
  %v560 = vshrl.u32 %v559, 7
  %v561 = vsub.s32 3, %v560
  %v562 = vrot.slane %v153, %v561
  %564 = vrot.lane.b32.xlu0 %v562, 64
  %v565 = vpop.permute.xlu0 %564
  %v567 = vadd.f32 %v553, %v565
  %v568 = vadd.f32 %v554, %v565
  %v569 = vadd.f32 %v555, %v565
  %v570 = vadd.f32 %v556, %v565
  %v571 = vadd.f32 %v557, %v565
  %v572 = vadd.f32 %v558, %v565
  %v573 = vpack.c.bf16 %v568, %v567
  %v574 = vpack.c.bf16 %v570, %v569
  %v575 = vpack.c.bf16 %v572, %v571
  %579 = vrot.lane.b32.xlu0 %v573, 64
  %v580 = vpop.permute.xlu0 %579
  %581 = vrot.lane.b32.xlu0 %v574, 64
  %v582 = vpop.permute.xlu0 %581
  %583 = vrot.lane.b32.xlu0 %v575, 64
  %v584 = vpop.permute.xlu0 %583
  %585 = vrot.lane.b32.xlu0 %v266, 32
  %v586 = vpop.permute.xlu0 %585
  %587 = vrot.lane.b32.xlu0 %v267, 32
  %v588 = vpop.permute.xlu0 %587
  %v592 = vsel %vm155, %v580, 0
  %v595 = vsel %vm155, %v582, 0
  %v598 = vsel %vm155, %v584, 0
  %600 = vmatprep.subr.bf16.mxu0 0
  %601 = vmatpush1.bf16.msra.mxu0 %v586
  %602 = vmatprep.subr.bf16.mxu0 0
  %603 = vmatpush1.bf16.msra.mxu0 %v588
  %604 = vmatprep.subr.bf16.mxu0 0
  %605 = vmatpush1.bf16.msra.mxu0 0
  %606 = vmatprep.subr.bf16.mxu0 0
  %607 = vmatpush1.bf16.msra.mxu0 0
  %608 = vmatprep.subr.bf16.mxu0 0
  %609 = vmatpush1.bf16.msra.mxu0 0
  %610 = vmatprep.subr.bf16.mxu0 0
  %611 = vmatpush1.bf16.msra.mxu0 0
  %612 = vmatprep.subr.bf16.mxu0 0
  %613 = vmatpush1.bf16.msra.mxu0 0
  %614 = vmatprep.subr.bf16.mxu0 0
  %615 = vmatpush1.bf16.msra.mxu0 0
  %616 = vmatprep.subr.bf16.mxu0 0
  %617 = vmatpush1.bf16.msra.mxu0 0
  %618 = vmatprep.subr.bf16.mxu0 0
  %619 = vmatpush1.bf16.msra.mxu0 0
  %620 = vmatprep.subr.bf16.mxu0 0
  %621 = vmatpush1.bf16.msra.mxu0 0
  %622 = vmatprep.subr.bf16.mxu0 0
  %623 = vmatpush1.bf16.msra.mxu0 0
  %624 = vmatprep.subr.bf16.mxu0 0
  %625 = vmatpush1.bf16.msra.mxu0 0
  %626 = vmatprep.subr.bf16.mxu0 0
  %627 = vmatpush1.bf16.msra.mxu0 0
  %628 = vmatprep.subr.bf16.mxu0 0
  %629 = vmatpush1.bf16.msra.mxu0 0
  %630 = vmatprep.subr.bf16.mxu0 0
  %631 = vmatpush1.bf16.msra.mxu0 0
  %632 = vmatprep.mubr.bf16.mxu0 0
  %633 = vmatmul.mubr.bf16.gmra.mrb[0].mxu0 %v592
  %v634 = vpop.f32.mrb[0].mxu0
  %v635 = vadd.f32 0.0, %v634
  %v636 = vpop.f32.mrb[0].mxu0
  %v637 = vpop.f32.mrb[0].mxu0
  %v638 = vadd.f32 0.0, %v637
  %v639 = vpop.f32.mrb[0].mxu0
  %640 = vmatprep.mubr.bf16.mxu0 0
  %641 = vmatmul.mubr.bf16.gmra.mrb[0].mxu0 %v595
  %v642 = vpop.f32.mrb[0].mxu0
  %v643 = vadd.f32 0.0, %v642
  %v644 = vpop.f32.mrb[0].mxu0
  %v645 = vpop.f32.mrb[0].mxu0
  %v646 = vadd.f32 0.0, %v645
  %v647 = vpop.f32.mrb[0].mxu0
  %648 = vmatprep.mubr.bf16.mxu0 0
  %649 = vmatmul.mubr.bf16.gmra.mrb[0].mxu0 %v598
  %v650 = vpop.f32.mrb[0].mxu0
  %v651 = vadd.f32 0.0, %v650
  %v652 = vpop.f32.mrb[0].mxu0
  %v653 = vpop.f32.mrb[0].mxu0
  %v654 = vadd.f32 0.0, %v653
  %v655 = vpop.f32.mrb[0].mxu0
  %656 = vdwg.mxu0
  %v657 = vadd.f32 %v143, %v635
  %v658 = vadd.f32 %v144, %v638
  %v659 = vadd.f32 %v145, %v643
  %v660 = vadd.f32 %v146, %v646
  %v661 = vadd.f32 %v147, %v651
  %v662 = vadd.f32 %v148, %v654
  %v663 = vlaneseq
  %v664 = vshrl.u32 %v663, 7
  %v665 = vsub.s32 4, %v664
  %v666 = vrot.slane %v153, %v665
  %v667 = vadd.f32 %v657, %v666
  %v668 = vadd.f32 %v658, %v666
  %v669 = vadd.f32 %v659, %v666
  %v670 = vadd.f32 %v660, %v666
  %v671 = vadd.f32 %v661, %v666
  %v672 = vadd.f32 %v662, %v666
  %v673 = vsel %vm155, %v667, 0.0
  %674 = vadd.xlane.f32.xlu0 %v673
  %v675 = vpop.xlane.xlu0 %674
  %v676 = vsel %vm155, %v668, 0.0
  %677 = vadd.xlane.f32.xlu0 %v676
  %v678 = vpop.xlane.xlu0 %677
  %v679 = vsel %vm155, %v669, 0.0
  %680 = vadd.xlane.f32.xlu0 %v679
  %v681 = vpop.xlane.xlu0 %680
  %v682 = vsel %vm155, %v670, 0.0
  %683 = vadd.xlane.f32.xlu0 %v682
  %v684 = vpop.xlane.xlu0 %683
  %v685 = vsel %vm155, %v671, 0.0
  %686 = vadd.xlane.f32.xlu0 %v685
  %v687 = vpop.xlane.xlu0 %686
  %v688 = vsel %vm155, %v672, 0.0
  %689 = vadd.xlane.f32.xlu0 %v688
  %v690 = vpop.xlane.xlu0 %689
  %v691 = vmul.f32 %v675, %v174
  %v692 = vmul.f32 %v678, %v174
  %v693 = vmul.f32 %v681, %v174
  %v694 = vmul.f32 %v684, %v174
  %v695 = vmul.f32 %v687, %v174
  %v696 = vmul.f32 %v690, %v174
  %v697 = vsub.f32 %v667, %v691
  %v698 = vsub.f32 %v668, %v692
  %v699 = vsub.f32 %v669, %v693
  %v700 = vsub.f32 %v670, %v694
  %v701 = vsub.f32 %v671, %v695
  %v702 = vsub.f32 %v672, %v696
  %v703 = vmul.f32 %v697, %v697
  %v704 = vmul.f32 %v698, %v698
  %v705 = vmul.f32 %v699, %v699
  %v706 = vmul.f32 %v700, %v700
  %v707 = vmul.f32 %v701, %v701
  %v708 = vmul.f32 %v702, %v702
  %v709 = vsel %vm155, %v703, 0.0
  %710 = vadd.xlane.f32.xlu0 %v709
  %v711 = vpop.xlane.xlu0 %710
  %v712 = vsel %vm155, %v704, 0.0
  %713 = vadd.xlane.f32.xlu0 %v712
  %v714 = vpop.xlane.xlu0 %713
  %v715 = vsel %vm155, %v705, 0.0
  %716 = vadd.xlane.f32.xlu0 %v715
  %v717 = vpop.xlane.xlu0 %716
  %v718 = vsel %vm155, %v706, 0.0
  %719 = vadd.xlane.f32.xlu0 %v718
  %v720 = vpop.xlane.xlu0 %719
  %v721 = vsel %vm155, %v707, 0.0
  %722 = vadd.xlane.f32.xlu0 %v721
  %v723 = vpop.xlane.xlu0 %722
  %v724 = vsel %vm155, %v708, 0.0
  %725 = vadd.xlane.f32.xlu0 %v724
  %v726 = vpop.xlane.xlu0 %725
  %v727 = vmul.f32 %v711, %v174
  %v728 = vmul.f32 %v714, %v174
  %v729 = vmul.f32 %v717, %v174
  %v730 = vmul.f32 %v720, %v174
  %v731 = vmul.f32 %v723, %v174
  %v732 = vmul.f32 %v726, %v174
  %v733 = vadd.f32 %v727, 1e-05
  %v734 = vadd.f32 %v728, 1e-05
  %v735 = vadd.f32 %v729, 1e-05
  %v736 = vadd.f32 %v730, 1e-05
  %v737 = vadd.f32 %v731, 1e-05
  %v738 = vadd.f32 %v732, 1e-05
  %v739 = vrsqrt.pop %v733
  %v740 = vrsqrt.pop %v734
  %v741 = vrsqrt.pop %v735
  %v742 = vrsqrt.pop %v736
  %v743 = vrsqrt.pop %v737
  %v744 = vrsqrt.pop %v738
  %v745 = vmul.f32 %v697, %v739
  %v746 = vmul.f32 %v698, %v740
  %v747 = vmul.f32 %v699, %v741
  %v748 = vmul.f32 %v700, %v742
  %v749 = vmul.f32 %v701, %v743
  %v750 = vmul.f32 %v702, %v744
  %v751 = vlaneseq
  %v752 = vshrl.u32 %v751, 7
  %v753 = vsub.s32 5, %v752
  %v754 = vrot.slane %v153, %v753
  %v755 = vmul.f32 %v745, %v754
  %v756 = vmul.f32 %v746, %v754
  %v757 = vmul.f32 %v747, %v754
  %v758 = vmul.f32 %v748, %v754
  %v759 = vmul.f32 %v749, %v754
  %v760 = vmul.f32 %v750, %v754
  %v761 = vlaneseq
  %v762 = vshrl.u32 %v761, 7
  %v763 = vsub.s32 6, %v762
  %v764 = vrot.slane %v153, %v763
  %v765 = vadd.f32 %v755, %v764
  %v766 = vadd.f32 %v756, %v764
  %v767 = vadd.f32 %v757, %v764
  %v768 = vadd.f32 %v758, %v764
  %v769 = vadd.f32 %v759, %v764
  %v770 = vadd.f32 %v760, %v764
  %v771 = vpack.c.bf16 %v766, %v765
  %v772 = vpack.c.bf16 %v768, %v767
  %v773 = vpack.c.bf16 %v770, %v769
  %v774 = vlaneseq
  %v775 = vshrl.u32 %v774, 7
  %v776 = vsub.s32 0, %v775
  %v777 = vrot.slane %v154, %v776
  %v778 = vunpack.c.h.b16 %v149
  %v779 = vunpack.c.h.b16 %v150
  %v780 = vunpack.c.h.b16 %v151
  %v781 = vunpack.c.h.b16 %v152
  %v782 = vpack.c.b16 %v779, %v778
  %v783 = vpack.c.b16 %v781, %v780
  %v787 = vsel %vm155, %v771, 0
  %v790 = vsel %vm155, %v772, 0
  %v793 = vsel %vm155, %v773, 0
  %795 = vmatprep.subr.bf16.mxu0 0
  %796 = vmatpush1.bf16.msra.mxu0 %v782
  %797 = vmatprep.subr.bf16.mxu0 0
  %798 = vmatpush1.bf16.msra.mxu0 %v783
  %799 = vmatprep.subr.bf16.mxu0 0
  %800 = vmatpush1.bf16.msra.mxu0 0
  %801 = vmatprep.subr.bf16.mxu0 0
  %802 = vmatpush1.bf16.msra.mxu0 0
  %803 = vmatprep.subr.bf16.mxu0 0
  %804 = vmatpush1.bf16.msra.mxu0 0
  %805 = vmatprep.subr.bf16.mxu0 0
  %806 = vmatpush1.bf16.msra.mxu0 0
  %807 = vmatprep.subr.bf16.mxu0 0
  %808 = vmatpush1.bf16.msra.mxu0 0
  %809 = vmatprep.subr.bf16.mxu0 0
  %810 = vmatpush1.bf16.msra.mxu0 0
  %811 = vmatprep.subr.bf16.mxu0 0
  %812 = vmatpush1.bf16.msra.mxu0 0
  %813 = vmatprep.subr.bf16.mxu0 0
  %814 = vmatpush1.bf16.msra.mxu0 0
  %815 = vmatprep.subr.bf16.mxu0 0
  %816 = vmatpush1.bf16.msra.mxu0 0
  %817 = vmatprep.subr.bf16.mxu0 0
  %818 = vmatpush1.bf16.msra.mxu0 0
  %819 = vmatprep.subr.bf16.mxu0 0
  %820 = vmatpush1.bf16.msra.mxu0 0
  %821 = vmatprep.subr.bf16.mxu0 0
  %822 = vmatpush1.bf16.msra.mxu0 0
  %823 = vmatprep.subr.bf16.mxu0 0
  %824 = vmatpush1.bf16.msra.mxu0 0
  %825 = vmatprep.subr.bf16.mxu0 0
  %826 = vmatpush1.bf16.msra.mxu0 0
  %827 = vmatprep.mubr.bf16.mxu0 0
  %828 = vmatmul.mubr.bf16.gmra.mrb[0].mxu0 %v787
  %v829 = vpop.f32.mrb[0].mxu0
  %v830 = vadd.f32 %v777, %v829
  %v831 = vpop.f32.mrb[0].mxu0
  %v832 = vpop.f32.mrb[0].mxu0
  %v833 = vadd.f32 %v777, %v832
  %v834 = vpop.f32.mrb[0].mxu0
  %835 = vmatprep.mubr.bf16.mxu0 0
  %836 = vmatmul.mubr.bf16.gmra.mrb[0].mxu0 %v790
  %v837 = vpop.f32.mrb[0].mxu0
  %v838 = vadd.f32 %v777, %v837
  %v839 = vpop.f32.mrb[0].mxu0
  %v840 = vpop.f32.mrb[0].mxu0
  %v841 = vadd.f32 %v777, %v840
  %v842 = vpop.f32.mrb[0].mxu0
  %843 = vmatprep.mubr.bf16.mxu0 0
  %844 = vmatmul.mubr.bf16.gmra.mrb[0].mxu0 %v793
  %v845 = vpop.f32.mrb[0].mxu0
  %v846 = vadd.f32 %v777, %v845
  %v847 = vpop.f32.mrb[0].mxu0
  %v848 = vpop.f32.mrb[0].mxu0
  %v849 = vadd.f32 %v777, %v848
  %v850 = vpop.f32.mrb[0].mxu0
  %851 = vdwg.mxu0
  %v852 = vmul.f32 %v830, 1.702
  %v853 = vmul.f32 %v833, 1.702
  %v854 = vmul.f32 %v838, 1.702
  %v855 = vmul.f32 %v841, 1.702
  %v856 = vmul.f32 %v846, 1.702
  %v857 = vmul.f32 %v849, 1.702
  %v858 = vxor.u32 %v852, 2147483648
  %v859 = vxor.u32 %v853, 2147483648
  %v860 = vxor.u32 %v854, 2147483648
  %v861 = vxor.u32 %v855, 2147483648
  %v862 = vxor.u32 %v856, 2147483648
  %v863 = vxor.u32 %v857, 2147483648
  %v864 = vmul.f32 %v858, 1.442695
  %v865 = vpow.pop %v864
  %v866 = vmul.f32 %v859, 1.442695
  %v867 = vpow.pop %v866
  %v868 = vmul.f32 %v860, 1.442695
  %v869 = vpow.pop %v868
  %v870 = vmul.f32 %v861, 1.442695
  %v871 = vpow.pop %v870
  %v872 = vmul.f32 %v862, 1.442695
  %v873 = vpow.pop %v872
  %v874 = vmul.f32 %v863, 1.442695
  %v875 = vpow.pop %v874
  %v876 = vadd.f32 %v865, 1.0
  %v877 = vadd.f32 %v867, 1.0
  %v878 = vadd.f32 %v869, 1.0
  %v879 = vadd.f32 %v871, 1.0
  %v880 = vadd.f32 %v873, 1.0
  %v881 = vadd.f32 %v875, 1.0
  %v882 = vrcp.pop %v876
  %v883 = vmul.f32 1.0, %v882
  %v884 = vrcp.pop %v877
  %v885 = vmul.f32 1.0, %v884
  %v886 = vrcp.pop %v878
  %v887 = vmul.f32 1.0, %v886
  %v888 = vrcp.pop %v879
  %v889 = vmul.f32 1.0, %v888
  %v890 = vrcp.pop %v880
  %v891 = vmul.f32 1.0, %v890
  %v892 = vrcp.pop %v881
  %v893 = vmul.f32 1.0, %v892
  %v894 = vmul.f32 %v830, %v883
  %v895 = vmul.f32 %v833, %v885
  %v896 = vmul.f32 %v838, %v887
  %v897 = vmul.f32 %v841, %v889
  %v898 = vmul.f32 %v846, %v891
  %v899 = vmul.f32 %v849, %v893
  %v900 = vpack.c.bf16 %v895, %v894
  %v901 = vpack.c.bf16 %v897, %v896
  %v902 = vpack.c.bf16 %v899, %v898
  %v903 = vld [vmem:[%s5] sm:$0xf]
  %v904 = vld [vmem:[%s5 + $0x4] sm:$0xf]
  %v905 = vld [vmem:[%s5 + $0x8] sm:$0xf]
  %v906 = vld [vmem:[%s5 + $0xc] sm:$0xf]
  %v907 = vld [vmem:[%s5 + $0x10] sm:$0xf]
  %v908 = vld [vmem:[%s5 + $0x14] sm:$0xf]
  %v909 = vld [vmem:[%s5 + $0x18] sm:$0xf]
  %v910 = vld [vmem:[%s5 + $0x1c] sm:$0xf]
  %v911 = vld [vmem:[%s5 + $0x20] sm:$0xf]
  %v912 = vld [vmem:[%s5 + $0x24] sm:$0xf]
  %v913 = vld [vmem:[%s5 + $0x28] sm:$0xf]
  %v914 = vld [vmem:[%s5 + $0x2c] sm:$0xf]
  %v915 = vld [vmem:[%s5 + $0x30] sm:$0xf]
  %v916 = vld [vmem:[%s5 + $0x34] sm:$0xf]
  %v917 = vld [vmem:[%s5 + $0x38] sm:$0xf]
  %v918 = vld [vmem:[%s5 + $0x3c] sm:$0xf]
  %v935 = vunpack.c.l.b16 %v903
  %v936 = vunpack.c.l.b16 %v904
  %v937 = vunpack.c.l.b16 %v905
  %v938 = vunpack.c.l.b16 %v906
  %v939 = vunpack.c.l.b16 %v907
  %v940 = vunpack.c.l.b16 %v908
  %v941 = vunpack.c.l.b16 %v909
  %v942 = vunpack.c.l.b16 %v910
  %v943 = vunpack.c.l.b16 %v911
  %v944 = vunpack.c.l.b16 %v912
  %v945 = vunpack.c.l.b16 %v913
  %v946 = vunpack.c.l.b16 %v914
  %v947 = vunpack.c.l.b16 %v915
  %v948 = vunpack.c.l.b16 %v916
  %v949 = vunpack.c.l.b16 %v917
  %v950 = vunpack.c.l.b16 %v918
  %v951 = vpack.c.b16 %v936, %v935
  %v952 = vpack.c.b16 %v938, %v937
  %v953 = vpack.c.b16 %v940, %v939
  %v954 = vpack.c.b16 %v942, %v941
  %v955 = vpack.c.b16 %v944, %v943
  %v956 = vpack.c.b16 %v946, %v945
  %v957 = vpack.c.b16 %v948, %v947
  %v958 = vpack.c.b16 %v950, %v949
  %967 = vmatprep.subr.bf16.mxu0 0
  %968 = vmatpush1.bf16.msra.mxu0 %v951
  %969 = vmatprep.subr.bf16.mxu0 0
  %970 = vmatpush1.bf16.msra.mxu0 %v952
  %971 = vmatprep.subr.bf16.mxu0 0
  %972 = vmatpush1.bf16.msra.mxu0 %v953
  %973 = vmatprep.subr.bf16.mxu0 0
  %974 = vmatpush1.bf16.msra.mxu0 %v954
  %975 = vmatprep.subr.bf16.mxu0 0
  %976 = vmatpush1.bf16.msra.mxu0 %v955
  %977 = vmatprep.subr.bf16.mxu0 0
  %978 = vmatpush1.bf16.msra.mxu0 %v956
  %979 = vmatprep.subr.bf16.mxu0 0
  %980 = vmatpush1.bf16.msra.mxu0 %v957
  %981 = vmatprep.subr.bf16.mxu0 0
  %982 = vmatpush1.bf16.msra.mxu0 %v958
  %983 = vmatprep.subr.bf16.mxu0 0
  %984 = vmatpush1.bf16.msra.mxu0 0
  %985 = vmatprep.subr.bf16.mxu0 0
  %986 = vmatpush1.bf16.msra.mxu0 0
  %987 = vmatprep.subr.bf16.mxu0 0
  %988 = vmatpush1.bf16.msra.mxu0 0
  %989 = vmatprep.subr.bf16.mxu0 0
  %990 = vmatpush1.bf16.msra.mxu0 0
  %991 = vmatprep.subr.bf16.mxu0 0
  %992 = vmatpush1.bf16.msra.mxu0 0
  %993 = vmatprep.subr.bf16.mxu0 0
  %994 = vmatpush1.bf16.msra.mxu0 0
  %995 = vmatprep.subr.bf16.mxu0 0
  %996 = vmatpush1.bf16.msra.mxu0 0
  %997 = vmatprep.subr.bf16.mxu0 0
  %998 = vmatpush1.bf16.msra.mxu0 0
  %999 = vmatprep.mubr.bf16.mxu0 0
  %1000 = vmatmul.mubr.bf16.gmra.mrb[0].mxu0 %v900
  %v1001 = vpop.f32.mrb[0].mxu0
  %v1002 = vadd.f32 0.0, %v1001
  %v1003 = vpop.f32.mrb[0].mxu0
  %v1004 = vpop.f32.mrb[0].mxu0
  %v1005 = vadd.f32 0.0, %v1004
  %v1006 = vpop.f32.mrb[0].mxu0
  %1007 = vmatprep.mubr.bf16.mxu0 0
  %1008 = vmatmul.mubr.bf16.gmra.mrb[0].mxu0 %v901
  %v1009 = vpop.f32.mrb[0].mxu0
  %v1010 = vadd.f32 0.0, %v1009
  %v1011 = vpop.f32.mrb[0].mxu0
  %v1012 = vpop.f32.mrb[0].mxu0
  %v1013 = vadd.f32 0.0, %v1012
  %v1014 = vpop.f32.mrb[0].mxu0
  %1015 = vmatprep.mubr.bf16.mxu0 0
  %1016 = vmatmul.mubr.bf16.gmra.mrb[0].mxu0 %v902
  %v1017 = vpop.f32.mrb[0].mxu0
  %v1018 = vadd.f32 0.0, %v1017
  %v1019 = vpop.f32.mrb[0].mxu0
  %v1020 = vpop.f32.mrb[0].mxu0
  %v1021 = vadd.f32 0.0, %v1020
  %v1022 = vpop.f32.mrb[0].mxu0
  %1023 = vdwg.mxu0
  %v1024 = vadd.f32 %v667, %v1002
  %v1025 = vadd.f32 %v668, %v1005
  %v1026 = vadd.f32 %v669, %v1010
  %v1027 = vadd.f32 %v670, %v1013
  %v1028 = vadd.f32 %v671, %v1018
  %v1029 = vadd.f32 %v672, %v1021
  %v1030 = vlaneseq
  %v1031 = vshrl.u32 %v1030, 7
  %v1032 = vsub.s32 7, %v1031
  %v1033 = vrot.slane %v153, %v1032
  %v1034 = vadd.f32 %v1024, %v1033
  %v1035 = vadd.f32 %v1025, %v1033
  %v1036 = vadd.f32 %v1026, %v1033
  %v1037 = vadd.f32 %v1027, %v1033
  %v1038 = vadd.f32 %v1028, %v1033
  %v1039 = vadd.f32 %v1029, %v1033
  %s1040 = scalar_lea.vmem %s4, 32
  %v1041 = vld [vmem:[%s1040] sm:$0xff]
  %v1042 = vld [vmem:[%s1040 + $0x8] sm:$0xff]
  %v1043 = vld [vmem:[%s1040 + $0x10] sm:$0xff]
  %v1044 = vld [vmem:[%s1040 + $0x18] sm:$0xff]
  %s1045 = scalar_lea.vmem %s6, 16
  %v1046 = vld [vmem:[%s1045] sm:$0xff]
  %v1047 = vld [vmem:[%s1045 + $0x8] sm:$0x1]
  %v1048 = vsel %vm155, %v1034, 0.0
  %1049 = vadd.xlane.f32.xlu0 %v1048
  %v1050 = vpop.xlane.xlu0 %1049
  %v1051 = vsel %vm155, %v1035, 0.0
  %1052 = vadd.xlane.f32.xlu0 %v1051
  %v1053 = vpop.xlane.xlu0 %1052
  %v1054 = vsel %vm155, %v1036, 0.0
  %1055 = vadd.xlane.f32.xlu0 %v1054
  %v1056 = vpop.xlane.xlu0 %1055
  %v1057 = vsel %vm155, %v1037, 0.0
  %1058 = vadd.xlane.f32.xlu0 %v1057
  %v1059 = vpop.xlane.xlu0 %1058
  %v1060 = vsel %vm155, %v1038, 0.0
  %1061 = vadd.xlane.f32.xlu0 %v1060
  %v1062 = vpop.xlane.xlu0 %1061
  %v1063 = vsel %vm155, %v1039, 0.0
  %1064 = vadd.xlane.f32.xlu0 %v1063
  %v1065 = vpop.xlane.xlu0 %1064
  %v1066 = vmul.f32 %v1050, %v174
  %v1067 = vmul.f32 %v1053, %v174
  %v1068 = vmul.f32 %v1056, %v174
  %v1069 = vmul.f32 %v1059, %v174
  %v1070 = vmul.f32 %v1062, %v174
  %v1071 = vmul.f32 %v1065, %v174
  %v1072 = vsub.f32 %v1034, %v1066
  %v1073 = vsub.f32 %v1035, %v1067
  %v1074 = vsub.f32 %v1036, %v1068
  %v1075 = vsub.f32 %v1037, %v1069
  %v1076 = vsub.f32 %v1038, %v1070
  %v1077 = vsub.f32 %v1039, %v1071
  %v1078 = vmul.f32 %v1072, %v1072
  %v1079 = vmul.f32 %v1073, %v1073
  %v1080 = vmul.f32 %v1074, %v1074
  %v1081 = vmul.f32 %v1075, %v1075
  %v1082 = vmul.f32 %v1076, %v1076
  %v1083 = vmul.f32 %v1077, %v1077
  %v1084 = vsel %vm155, %v1078, 0.0
  %1085 = vadd.xlane.f32.xlu0 %v1084
  %v1086 = vpop.xlane.xlu0 %1085
  %v1087 = vsel %vm155, %v1079, 0.0
  %1088 = vadd.xlane.f32.xlu0 %v1087
  %v1089 = vpop.xlane.xlu0 %1088
  %v1090 = vsel %vm155, %v1080, 0.0
  %1091 = vadd.xlane.f32.xlu0 %v1090
  %v1092 = vpop.xlane.xlu0 %1091
  %v1093 = vsel %vm155, %v1081, 0.0
  %1094 = vadd.xlane.f32.xlu0 %v1093
  %v1095 = vpop.xlane.xlu0 %1094
  %v1096 = vsel %vm155, %v1082, 0.0
  %1097 = vadd.xlane.f32.xlu0 %v1096
  %v1098 = vpop.xlane.xlu0 %1097
  %v1099 = vsel %vm155, %v1083, 0.0
  %1100 = vadd.xlane.f32.xlu0 %v1099
  %v1101 = vpop.xlane.xlu0 %1100
  %v1102 = vmul.f32 %v1086, %v174
  %v1103 = vmul.f32 %v1089, %v174
  %v1104 = vmul.f32 %v1092, %v174
  %v1105 = vmul.f32 %v1095, %v174
  %v1106 = vmul.f32 %v1098, %v174
  %v1107 = vmul.f32 %v1101, %v174
  %v1108 = vadd.f32 %v1102, 1e-05
  %v1109 = vadd.f32 %v1103, 1e-05
  %v1110 = vadd.f32 %v1104, 1e-05
  %v1111 = vadd.f32 %v1105, 1e-05
  %v1112 = vadd.f32 %v1106, 1e-05
  %v1113 = vadd.f32 %v1107, 1e-05
  %v1114 = vrsqrt.pop %v1108
  %v1115 = vrsqrt.pop %v1109
  %v1116 = vrsqrt.pop %v1110
  %v1117 = vrsqrt.pop %v1111
  %v1118 = vrsqrt.pop %v1112
  %v1119 = vrsqrt.pop %v1113
  %v1120 = vmul.f32 %v1072, %v1114
  %v1121 = vmul.f32 %v1073, %v1115
  %v1122 = vmul.f32 %v1074, %v1116
  %v1123 = vmul.f32 %v1075, %v1117
  %v1124 = vmul.f32 %v1076, %v1118
  %v1125 = vmul.f32 %v1077, %v1119
  %v1126 = vlaneseq
  %v1127 = vshrl.u32 %v1126, 7
  %v1128 = vsub.s32 0, %v1127
  %v1129 = vrot.slane %v1046, %v1128
  %v1130 = vmul.f32 %v1120, %v1129
  %v1131 = vmul.f32 %v1121, %v1129
  %v1132 = vmul.f32 %v1122, %v1129
  %v1133 = vmul.f32 %v1123, %v1129
  %v1134 = vmul.f32 %v1124, %v1129
  %v1135 = vmul.f32 %v1125, %v1129
  %v1136 = vlaneseq
  %v1137 = vshrl.u32 %v1136, 7
  %v1138 = vsub.s32 1, %v1137
  %v1139 = vrot.slane %v1046, %v1138
  %v1140 = vadd.f32 %v1130, %v1139
  %v1141 = vadd.f32 %v1131, %v1139
  %v1142 = vadd.f32 %v1132, %v1139
  %v1143 = vadd.f32 %v1133, %v1139
  %v1144 = vadd.f32 %v1134, %v1139
  %v1145 = vadd.f32 %v1135, %v1139
  %v1146 = vpack.c.bf16 %v1141, %v1140
  %v1147 = vpack.c.bf16 %v1143, %v1142
  %v1148 = vpack.c.bf16 %v1145, %v1144
  %v1153 = vunpack.c.l.b16 %v1041
  %v1154 = vunpack.c.l.b16 %v1042
  %v1155 = vunpack.c.l.b16 %v1043
  %v1156 = vunpack.c.l.b16 %v1044
  %v1157 = vpack.c.b16 %v1154, %v1153
  %v1158 = vpack.c.b16 %v1156, %v1155
  %v1162 = vsel %vm155, %v1146, 0
  %v1165 = vsel %vm155, %v1147, 0
  %v1168 = vsel %vm155, %v1148, 0
  %1170 = vmatprep.subr.bf16.mxu0 0
  %1171 = vmatpush1.bf16.msra.mxu0 %v1157
  %1172 = vmatprep.subr.bf16.mxu0 0
  %1173 = vmatpush1.bf16.msra.mxu0 %v1158
  %1174 = vmatprep.subr.bf16.mxu0 0
  %1175 = vmatpush1.bf16.msra.mxu0 0
  %1176 = vmatprep.subr.bf16.mxu0 0
  %1177 = vmatpush1.bf16.msra.mxu0 0
  %1178 = vmatprep.subr.bf16.mxu0 0
  %1179 = vmatpush1.bf16.msra.mxu0 0
  %1180 = vmatprep.subr.bf16.mxu0 0
  %1181 = vmatpush1.bf16.msra.mxu0 0
  %1182 = vmatprep.subr.bf16.mxu0 0
  %1183 = vmatpush1.bf16.msra.mxu0 0
  %1184 = vmatprep.subr.bf16.mxu0 0
  %1185 = vmatpush1.bf16.msra.mxu0 0
  %1186 = vmatprep.subr.bf16.mxu0 0
  %1187 = vmatpush1.bf16.msra.mxu0 0
  %1188 = vmatprep.subr.bf16.mxu0 0
  %1189 = vmatpush1.bf16.msra.mxu0 0
  %1190 = vmatprep.subr.bf16.mxu0 0
  %1191 = vmatpush1.bf16.msra.mxu0 0
  %1192 = vmatprep.subr.bf16.mxu0 0
  %1193 = vmatpush1.bf16.msra.mxu0 0
  %1194 = vmatprep.subr.bf16.mxu0 0
  %1195 = vmatpush1.bf16.msra.mxu0 0
  %1196 = vmatprep.subr.bf16.mxu0 0
  %1197 = vmatpush1.bf16.msra.mxu0 0
  %1198 = vmatprep.subr.bf16.mxu0 0
  %1199 = vmatpush1.bf16.msra.mxu0 0
  %1200 = vmatprep.subr.bf16.mxu0 0
  %1201 = vmatpush1.bf16.msra.mxu0 0
  %1202 = vmatprep.mubr.bf16.mxu0 0
  %1203 = vmatmul.mubr.bf16.gmra.mrb[0].mxu0 %v1162
  %v1204 = vpop.f32.mrb[0].mxu0
  %v1205 = vadd.f32 0.0, %v1204
  %v1206 = vpop.f32.mrb[0].mxu0
  %v1207 = vpop.f32.mrb[0].mxu0
  %v1208 = vadd.f32 0.0, %v1207
  %v1209 = vpop.f32.mrb[0].mxu0
  %1210 = vmatprep.mubr.bf16.mxu0 0
  %1211 = vmatmul.mubr.bf16.gmra.mrb[0].mxu0 %v1165
  %v1212 = vpop.f32.mrb[0].mxu0
  %v1213 = vadd.f32 0.0, %v1212
  %v1214 = vpop.f32.mrb[0].mxu0
  %v1215 = vpop.f32.mrb[0].mxu0
  %v1216 = vadd.f32 0.0, %v1215
  %v1217 = vpop.f32.mrb[0].mxu0
  %1218 = vmatprep.mubr.bf16.mxu0 0
  %1219 = vmatmul.mubr.bf16.gmra.mrb[0].mxu0 %v1168
  %v1220 = vpop.f32.mrb[0].mxu0
  %v1221 = vadd.f32 0.0, %v1220
  %v1222 = vpop.f32.mrb[0].mxu0
  %v1223 = vpop.f32.mrb[0].mxu0
  %v1224 = vadd.f32 0.0, %v1223
  %v1225 = vpop.f32.mrb[0].mxu0
  %1226 = vdwg.mxu0
  %v1227 = vlaneseq
  %v1228 = vshrl.u32 %v1227, 7
  %v1229 = vsub.s32 2, %v1228
  %v1230 = vrot.slane %v1046, %v1229
  %v1231 = vadd.f32 %v1205, %v1230
  %v1232 = vadd.f32 %v1208, %v1230
  %v1233 = vadd.f32 %v1213, %v1230
  %v1234 = vadd.f32 %v1216, %v1230
  %v1235 = vadd.f32 %v1221, %v1230
  %v1236 = vadd.f32 %v1224, %v1230
  %v1237 = vsub.f32 %v1205, %v1216
  %v1238 = vsub.f32 %v1208, %v1221
  %v1239 = vsub.f32 %v1213, %v1224
  %v1240 = vsub.f32 %v1216, %v1205
  %v1241 = vsub.f32 %v1221, %v1208
  %v1242 = vsub.f32 %v1224, %v1213
  %1249 = vrot.lane.b32.xlu0 %v1237, 96
  %v1250 = vpop.permute.xlu0 %1249
  %1251 = vrot.lane.b32.xlu0 %v1238, 96
  %v1252 = vpop.permute.xlu0 %1251
  %1253 = vrot.lane.b32.xlu0 %v1239, 96
  %v1254 = vpop.permute.xlu0 %1253
  %1255 = vrot.lane.b32.xlu0 %v1240, 96
  %v1256 = vpop.permute.xlu0 %1255
  %1257 = vrot.lane.b32.xlu0 %v1241, 96
  %v1258 = vpop.permute.xlu0 %1257
  %1259 = vrot.lane.b32.xlu0 %v1242, 96
  %v1260 = vpop.permute.xlu0 %1259
  %v1267 = vmul.f32 %v1231, %v1250
  %v1268 = vmul.f32 %v1232, %v1252
  %v1269 = vmul.f32 %v1233, %v1254
  %v1270 = vmul.f32 %v1234, %v1256
  %v1271 = vmul.f32 %v1235, %v1258
  %v1272 = vmul.f32 %v1236, %v1260
  %v1273 = vpack.c.bf16 %v1268, %v1267
  %v1274 = vpack.c.bf16 %v1270, %v1269
  %v1275 = vpack.c.bf16 %v1272, %v1271
  %v1277 = vsel %vm155, %v1273, 0
  %v1280 = vsel %vm155, %v1274, 0
  %v1283 = vsel %vm155, %v1275, 0
  %1285 = vmatprep.subr.bf16.mxu0 0
  %1286 = vmatpush1.bf16.msra.mxu0 %v393
  %1287 = vmatprep.subr.bf16.mxu0 0
  %1288 = vmatpush1.bf16.msra.mxu0 %v394
  %1289 = vmatprep.subr.bf16.mxu0 0
  %1290 = vmatpush1.bf16.msra.mxu0 0
  %1291 = vmatprep.subr.bf16.mxu0 0
  %1292 = vmatpush1.bf16.msra.mxu0 0
  %1293 = vmatprep.subr.bf16.mxu0 0
  %1294 = vmatpush1.bf16.msra.mxu0 0
  %1295 = vmatprep.subr.bf16.mxu0 0
  %1296 = vmatpush1.bf16.msra.mxu0 0
  %1297 = vmatprep.subr.bf16.mxu0 0
  %1298 = vmatpush1.bf16.msra.mxu0 0
  %1299 = vmatprep.subr.bf16.mxu0 0
  %1300 = vmatpush1.bf16.msra.mxu0 0
  %1301 = vmatprep.subr.bf16.mxu0 0
  %1302 = vmatpush1.bf16.msra.mxu0 0
  %1303 = vmatprep.subr.bf16.mxu0 0
  %1304 = vmatpush1.bf16.msra.mxu0 0
  %1305 = vmatprep.subr.bf16.mxu0 0
  %1306 = vmatpush1.bf16.msra.mxu0 0
  %1307 = vmatprep.subr.bf16.mxu0 0
  %1308 = vmatpush1.bf16.msra.mxu0 0
  %1309 = vmatprep.subr.bf16.mxu0 0
  %1310 = vmatpush1.bf16.msra.mxu0 0
  %1311 = vmatprep.subr.bf16.mxu0 0
  %1312 = vmatpush1.bf16.msra.mxu0 0
  %1313 = vmatprep.subr.bf16.mxu0 0
  %1314 = vmatpush1.bf16.msra.mxu0 0
  %1315 = vmatprep.subr.bf16.mxu0 0
  %1316 = vmatpush1.bf16.msra.mxu0 0
  %1317 = vmatprep.mubr.bf16.mxu0 0
  %1318 = vmatmul.mubr.bf16.gmra.mrb[0].mxu0 %v1277
  %v1319 = vpop.f32.mrb[0].mxu0
  %v1320 = vadd.f32 0.0, %v1319
  %v1321 = vpop.f32.mrb[0].mxu0
  %v1322 = vpop.f32.mrb[0].mxu0
  %v1323 = vadd.f32 0.0, %v1322
  %v1324 = vpop.f32.mrb[0].mxu0
  %1325 = vmatprep.mubr.bf16.mxu0 0
  %1326 = vmatmul.mubr.bf16.gmra.mrb[0].mxu0 %v1280
  %v1327 = vpop.f32.mrb[0].mxu0
  %v1328 = vadd.f32 0.0, %v1327
  %v1329 = vpop.f32.mrb[0].mxu0
  %v1330 = vpop.f32.mrb[0].mxu0
  %v1331 = vadd.f32 0.0, %v1330
  %v1332 = vpop.f32.mrb[0].mxu0
  %1333 = vmatprep.mubr.bf16.mxu0 0
  %1334 = vmatmul.mubr.bf16.gmra.mrb[0].mxu0 %v1283
  %v1335 = vpop.f32.mrb[0].mxu0
  %v1336 = vadd.f32 0.0, %v1335
  %v1337 = vpop.f32.mrb[0].mxu0
  %v1338 = vpop.f32.mrb[0].mxu0
  %v1339 = vadd.f32 0.0, %v1338
  %v1340 = vpop.f32.mrb[0].mxu0
  %1341 = vdwg.mxu0
  %v1342 = vmul.f32 %v1320, 0.35355338
  %v1343 = vmul.f32 %v1323, 0.35355338
  %v1344 = vmul.f32 %v1328, 0.35355338
  %v1345 = vmul.f32 %v1331, 0.35355338
  %v1346 = vmul.f32 %v1336, 0.35355338
  %v1347 = vmul.f32 %v1339, 0.35355338
  %v1348 = vxor.u32 %v1342, 2147483648
  %v1349 = vxor.u32 %v1343, 2147483648
  %v1350 = vxor.u32 %v1344, 2147483648
  %v1351 = vxor.u32 %v1345, 2147483648
  %v1352 = vxor.u32 %v1346, 2147483648
  %v1353 = vxor.u32 %v1347, 2147483648
  %v1354 = vmul.f32 %v1348, 1.442695
  %v1355 = vpow.pop %v1354
  %v1356 = vmul.f32 %v1349, 1.442695
  %v1357 = vpow.pop %v1356
  %v1358 = vmul.f32 %v1350, 1.442695
  %v1359 = vpow.pop %v1358
  %v1360 = vmul.f32 %v1351, 1.442695
  %v1361 = vpow.pop %v1360
  %v1362 = vmul.f32 %v1352, 1.442695
  %v1363 = vpow.pop %v1362
  %v1364 = vmul.f32 %v1353, 1.442695
  %v1365 = vpow.pop %v1364
  %v1366 = vadd.f32 %v1355, 1.0
  %v1367 = vadd.f32 %v1357, 1.0
  %v1368 = vadd.f32 %v1359, 1.0
  %v1369 = vadd.f32 %v1361, 1.0
  %v1370 = vadd.f32 %v1363, 1.0
  %v1371 = vadd.f32 %v1365, 1.0
  %v1372 = vrcp.pop %v1366
  %v1373 = vmul.f32 1.0, %v1372
  %v1374 = vrcp.pop %v1367
  %v1375 = vmul.f32 1.0, %v1374
  %v1376 = vrcp.pop %v1368
  %v1377 = vmul.f32 1.0, %v1376
  %v1378 = vrcp.pop %v1369
  %v1379 = vmul.f32 1.0, %v1378
  %v1380 = vrcp.pop %v1370
  %v1381 = vmul.f32 1.0, %v1380
  %v1382 = vrcp.pop %v1371
  %v1383 = vmul.f32 1.0, %v1382
  %1384 = vrot.lane.b32.xlu0 %v1237, 64
  %v1385 = vpop.permute.xlu0 %1384
  %1386 = vrot.lane.b32.xlu0 %v1238, 64
  %v1387 = vpop.permute.xlu0 %1386
  %1388 = vrot.lane.b32.xlu0 %v1239, 64
  %v1389 = vpop.permute.xlu0 %1388
  %1390 = vrot.lane.b32.xlu0 %v1240, 64
  %v1391 = vpop.permute.xlu0 %1390
  %1392 = vrot.lane.b32.xlu0 %v1241, 64
  %v1393 = vpop.permute.xlu0 %1392
  %1394 = vrot.lane.b32.xlu0 %v1242, 64
  %v1395 = vpop.permute.xlu0 %1394
  %v1402 = vmul.f32 %v1373, %v1385
  %v1403 = vmul.f32 %v1375, %v1387
  %v1404 = vmul.f32 %v1377, %v1389
  %v1405 = vmul.f32 %v1379, %v1391
  %v1406 = vmul.f32 %v1381, %v1393
  %v1407 = vmul.f32 %v1383, %v1395
  %1414 = vrot.lane.b32.xlu0 %v1402, 64
  %v1415 = vpop.permute.xlu0 %1414
  %1416 = vrot.lane.b32.xlu0 %v1403, 64
  %v1417 = vpop.permute.xlu0 %1416
  %1418 = vrot.lane.b32.xlu0 %v1404, 64
  %v1419 = vpop.permute.xlu0 %1418
  %1420 = vrot.lane.b32.xlu0 %v1405, 64
  %v1421 = vpop.permute.xlu0 %1420
  %1422 = vrot.lane.b32.xlu0 %v1406, 64
  %v1423 = vpop.permute.xlu0 %1422
  %1424 = vrot.lane.b32.xlu0 %v1407, 64
  %v1425 = vpop.permute.xlu0 %1424
  %v1432 = vadd.f32 %v1216, %v1415
  %v1433 = vadd.f32 %v1221, %v1417
  %v1434 = vadd.f32 %v1224, %v1419
  %v1435 = vadd.f32 %v1205, %v1421
  %v1436 = vadd.f32 %v1208, %v1423
  %v1437 = vadd.f32 %v1213, %v1425
  %v1438 = vlaneseq
  %v1439 = vshrl.u32 %v1438, 7
  %v1440 = vsub.s32 3, %v1439
  %v1441 = vrot.slane %v1046, %v1440
  %1443 = vrot.lane.b32.xlu0 %v1441, 64
  %v1444 = vpop.permute.xlu0 %1443
  %v1446 = vadd.f32 %v1432, %v1444
  %v1447 = vadd.f32 %v1433, %v1444
  %v1448 = vadd.f32 %v1434, %v1444
  %v1449 = vadd.f32 %v1435, %v1444
  %v1450 = vadd.f32 %v1436, %v1444
  %v1451 = vadd.f32 %v1437, %v1444
  %v1452 = vpack.c.bf16 %v1447, %v1446
  %v1453 = vpack.c.bf16 %v1449, %v1448
  %v1454 = vpack.c.bf16 %v1451, %v1450
  %1458 = vrot.lane.b32.xlu0 %v1452, 64
  %v1459 = vpop.permute.xlu0 %1458
  %1460 = vrot.lane.b32.xlu0 %v1453, 64
  %v1461 = vpop.permute.xlu0 %1460
  %1462 = vrot.lane.b32.xlu0 %v1454, 64
  %v1463 = vpop.permute.xlu0 %1462
  %1464 = vrot.lane.b32.xlu0 %v1157, 32
  %v1465 = vpop.permute.xlu0 %1464
  %1466 = vrot.lane.b32.xlu0 %v1158, 32
  %v1467 = vpop.permute.xlu0 %1466
  %v1471 = vsel %vm155, %v1459, 0
  %v1474 = vsel %vm155, %v1461, 0
  %v1477 = vsel %vm155, %v1463, 0
  %1479 = vmatprep.subr.bf16.mxu0 0
  %1480 = vmatpush1.bf16.msra.mxu0 %v1465
  %1481 = vmatprep.subr.bf16.mxu0 0
  %1482 = vmatpush1.bf16.msra.mxu0 %v1467
  %1483 = vmatprep.subr.bf16.mxu0 0
  %1484 = vmatpush1.bf16.msra.mxu0 0
  %1485 = vmatprep.subr.bf16.mxu0 0
  %1486 = vmatpush1.bf16.msra.mxu0 0
  %1487 = vmatprep.subr.bf16.mxu0 0
  %1488 = vmatpush1.bf16.msra.mxu0 0
  %1489 = vmatprep.subr.bf16.mxu0 0
  %1490 = vmatpush1.bf16.msra.mxu0 0
  %1491 = vmatprep.subr.bf16.mxu0 0
  %1492 = vmatpush1.bf16.msra.mxu0 0
  %1493 = vmatprep.subr.bf16.mxu0 0
  %1494 = vmatpush1.bf16.msra.mxu0 0
  %1495 = vmatprep.subr.bf16.mxu0 0
  %1496 = vmatpush1.bf16.msra.mxu0 0
  %1497 = vmatprep.subr.bf16.mxu0 0
  %1498 = vmatpush1.bf16.msra.mxu0 0
  %1499 = vmatprep.subr.bf16.mxu0 0
  %1500 = vmatpush1.bf16.msra.mxu0 0
  %1501 = vmatprep.subr.bf16.mxu0 0
  %1502 = vmatpush1.bf16.msra.mxu0 0
  %1503 = vmatprep.subr.bf16.mxu0 0
  %1504 = vmatpush1.bf16.msra.mxu0 0
  %1505 = vmatprep.subr.bf16.mxu0 0
  %1506 = vmatpush1.bf16.msra.mxu0 0
  %1507 = vmatprep.subr.bf16.mxu0 0
  %1508 = vmatpush1.bf16.msra.mxu0 0
  %1509 = vmatprep.subr.bf16.mxu0 0
  %1510 = vmatpush1.bf16.msra.mxu0 0
  %1511 = vmatprep.mubr.bf16.mxu0 0
  %1512 = vmatmul.mubr.bf16.gmra.mrb[0].mxu0 %v1471
  %v1513 = vpop.f32.mrb[0].mxu0
  %v1514 = vadd.f32 0.0, %v1513
  %v1515 = vpop.f32.mrb[0].mxu0
  %v1516 = vpop.f32.mrb[0].mxu0
  %v1517 = vadd.f32 0.0, %v1516
  %v1518 = vpop.f32.mrb[0].mxu0
  %1519 = vmatprep.mubr.bf16.mxu0 0
  %1520 = vmatmul.mubr.bf16.gmra.mrb[0].mxu0 %v1474
  %v1521 = vpop.f32.mrb[0].mxu0
  %v1522 = vadd.f32 0.0, %v1521
  %v1523 = vpop.f32.mrb[0].mxu0
  %v1524 = vpop.f32.mrb[0].mxu0
  %v1525 = vadd.f32 0.0, %v1524
  %v1526 = vpop.f32.mrb[0].mxu0
  %1527 = vmatprep.mubr.bf16.mxu0 0
  %1528 = vmatmul.mubr.bf16.gmra.mrb[0].mxu0 %v1477
  %v1529 = vpop.f32.mrb[0].mxu0
  %v1530 = vadd.f32 0.0, %v1529
  %v1531 = vpop.f32.mrb[0].mxu0
  %v1532 = vpop.f32.mrb[0].mxu0
  %v1533 = vadd.f32 0.0, %v1532
  %v1534 = vpop.f32.mrb[0].mxu0
  %1535 = vdwg.mxu0
  %v1536 = vadd.f32 %v1034, %v1514
  %v1537 = vadd.f32 %v1035, %v1517
  %v1538 = vadd.f32 %v1036, %v1522
  %v1539 = vadd.f32 %v1037, %v1525
  %v1540 = vadd.f32 %v1038, %v1530
  %v1541 = vadd.f32 %v1039, %v1533
  %v1542 = vlaneseq
  %v1543 = vshrl.u32 %v1542, 7
  %v1544 = vsub.s32 4, %v1543
  %v1545 = vrot.slane %v1046, %v1544
  %v1546 = vadd.f32 %v1536, %v1545
  %v1547 = vadd.f32 %v1537, %v1545
  %v1548 = vadd.f32 %v1538, %v1545
  %v1549 = vadd.f32 %v1539, %v1545
  %v1550 = vadd.f32 %v1540, %v1545
  %v1551 = vadd.f32 %v1541, %v1545
  %v1552 = vsel %vm155, %v1546, 0.0
  %1553 = vadd.xlane.f32.xlu0 %v1552
  %v1554 = vpop.xlane.xlu0 %1553
  %v1555 = vsel %vm155, %v1547, 0.0
  %1556 = vadd.xlane.f32.xlu0 %v1555
  %v1557 = vpop.xlane.xlu0 %1556
  %v1558 = vsel %vm155, %v1548, 0.0
  %1559 = vadd.xlane.f32.xlu0 %v1558
  %v1560 = vpop.xlane.xlu0 %1559
  %v1561 = vsel %vm155, %v1549, 0.0
  %1562 = vadd.xlane.f32.xlu0 %v1561
  %v1563 = vpop.xlane.xlu0 %1562
  %v1564 = vsel %vm155, %v1550, 0.0
  %1565 = vadd.xlane.f32.xlu0 %v1564
  %v1566 = vpop.xlane.xlu0 %1565
  %v1567 = vsel %vm155, %v1551, 0.0
  %1568 = vadd.xlane.f32.xlu0 %v1567
  %v1569 = vpop.xlane.xlu0 %1568
  %v1570 = vmul.f32 %v1554, %v174
  %v1571 = vmul.f32 %v1557, %v174
  %v1572 = vmul.f32 %v1560, %v174
  %v1573 = vmul.f32 %v1563, %v174
  %v1574 = vmul.f32 %v1566, %v174
  %v1575 = vmul.f32 %v1569, %v174
  %v1576 = vsub.f32 %v1546, %v1570
  %v1577 = vsub.f32 %v1547, %v1571
  %v1578 = vsub.f32 %v1548, %v1572
  %v1579 = vsub.f32 %v1549, %v1573
  %v1580 = vsub.f32 %v1550, %v1574
  %v1581 = vsub.f32 %v1551, %v1575
  %v1582 = vmul.f32 %v1576, %v1576
  %v1583 = vmul.f32 %v1577, %v1577
  %v1584 = vmul.f32 %v1578, %v1578
  %v1585 = vmul.f32 %v1579, %v1579
  %v1586 = vmul.f32 %v1580, %v1580
  %v1587 = vmul.f32 %v1581, %v1581
  %v1588 = vsel %vm155, %v1582, 0.0
  %1589 = vadd.xlane.f32.xlu0 %v1588
  %v1590 = vpop.xlane.xlu0 %1589
  %v1591 = vsel %vm155, %v1583, 0.0
  %1592 = vadd.xlane.f32.xlu0 %v1591
  %v1593 = vpop.xlane.xlu0 %1592
  %v1594 = vsel %vm155, %v1584, 0.0
  %1595 = vadd.xlane.f32.xlu0 %v1594
  %v1596 = vpop.xlane.xlu0 %1595
  %v1597 = vsel %vm155, %v1585, 0.0
  %1598 = vadd.xlane.f32.xlu0 %v1597
  %v1599 = vpop.xlane.xlu0 %1598
  %v1600 = vsel %vm155, %v1586, 0.0
  %1601 = vadd.xlane.f32.xlu0 %v1600
  %v1602 = vpop.xlane.xlu0 %1601
  %v1603 = vsel %vm155, %v1587, 0.0
  %1604 = vadd.xlane.f32.xlu0 %v1603
  %v1605 = vpop.xlane.xlu0 %1604
  %v1606 = vmul.f32 %v1590, %v174
  %v1607 = vmul.f32 %v1593, %v174
  %v1608 = vmul.f32 %v1596, %v174
  %v1609 = vmul.f32 %v1599, %v174
  %v1610 = vmul.f32 %v1602, %v174
  %v1611 = vmul.f32 %v1605, %v174
  %v1612 = vadd.f32 %v1606, 1e-05
  %v1613 = vadd.f32 %v1607, 1e-05
  %v1614 = vadd.f32 %v1608, 1e-05
  %v1615 = vadd.f32 %v1609, 1e-05
  %v1616 = vadd.f32 %v1610, 1e-05
  %v1617 = vadd.f32 %v1611, 1e-05
  %v1618 = vrsqrt.pop %v1612
  %v1619 = vrsqrt.pop %v1613
  %v1620 = vrsqrt.pop %v1614
  %v1621 = vrsqrt.pop %v1615
  %v1622 = vrsqrt.pop %v1616
  %v1623 = vrsqrt.pop %v1617
  %v1624 = vmul.f32 %v1576, %v1618
  %v1625 = vmul.f32 %v1577, %v1619
  %v1626 = vmul.f32 %v1578, %v1620
  %v1627 = vmul.f32 %v1579, %v1621
  %v1628 = vmul.f32 %v1580, %v1622
  %v1629 = vmul.f32 %v1581, %v1623
  %v1630 = vlaneseq
  %v1631 = vshrl.u32 %v1630, 7
  %v1632 = vsub.s32 5, %v1631
  %v1633 = vrot.slane %v1046, %v1632
  %v1634 = vmul.f32 %v1624, %v1633
  %v1635 = vmul.f32 %v1625, %v1633
  %v1636 = vmul.f32 %v1626, %v1633
  %v1637 = vmul.f32 %v1627, %v1633
  %v1638 = vmul.f32 %v1628, %v1633
  %v1639 = vmul.f32 %v1629, %v1633
  %v1640 = vlaneseq
  %v1641 = vshrl.u32 %v1640, 7
  %v1642 = vsub.s32 6, %v1641
  %v1643 = vrot.slane %v1046, %v1642
  %v1644 = vadd.f32 %v1634, %v1643
  %v1645 = vadd.f32 %v1635, %v1643
  %v1646 = vadd.f32 %v1636, %v1643
  %v1647 = vadd.f32 %v1637, %v1643
  %v1648 = vadd.f32 %v1638, %v1643
  %v1649 = vadd.f32 %v1639, %v1643
  %v1650 = vpack.c.bf16 %v1645, %v1644
  %v1651 = vpack.c.bf16 %v1647, %v1646
  %v1652 = vpack.c.bf16 %v1649, %v1648
  %v1653 = vlaneseq
  %v1654 = vshrl.u32 %v1653, 7
  %v1655 = vsub.s32 0, %v1654
  %v1656 = vrot.slane %v1047, %v1655
  %v1657 = vunpack.c.h.b16 %v1041
  %v1658 = vunpack.c.h.b16 %v1042
  %v1659 = vunpack.c.h.b16 %v1043
  %v1660 = vunpack.c.h.b16 %v1044
  %v1661 = vpack.c.b16 %v1658, %v1657
  %v1662 = vpack.c.b16 %v1660, %v1659
  %v1666 = vsel %vm155, %v1650, 0
  %v1669 = vsel %vm155, %v1651, 0
  %v1672 = vsel %vm155, %v1652, 0
  %1674 = vmatprep.subr.bf16.mxu0 0
  %1675 = vmatpush1.bf16.msra.mxu0 %v1661
  %1676 = vmatprep.subr.bf16.mxu0 0
  %1677 = vmatpush1.bf16.msra.mxu0 %v1662
  %1678 = vmatprep.subr.bf16.mxu0 0
  %1679 = vmatpush1.bf16.msra.mxu0 0
  %1680 = vmatprep.subr.bf16.mxu0 0
  %1681 = vmatpush1.bf16.msra.mxu0 0
  %1682 = vmatprep.subr.bf16.mxu0 0
  %1683 = vmatpush1.bf16.msra.mxu0 0
  %1684 = vmatprep.subr.bf16.mxu0 0
  %1685 = vmatpush1.bf16.msra.mxu0 0
  %1686 = vmatprep.subr.bf16.mxu0 0
  %1687 = vmatpush1.bf16.msra.mxu0 0
  %1688 = vmatprep.subr.bf16.mxu0 0
  %1689 = vmatpush1.bf16.msra.mxu0 0
  %1690 = vmatprep.subr.bf16.mxu0 0
  %1691 = vmatpush1.bf16.msra.mxu0 0
  %1692 = vmatprep.subr.bf16.mxu0 0
  %1693 = vmatpush1.bf16.msra.mxu0 0
  %1694 = vmatprep.subr.bf16.mxu0 0
  %1695 = vmatpush1.bf16.msra.mxu0 0
  %1696 = vmatprep.subr.bf16.mxu0 0
  %1697 = vmatpush1.bf16.msra.mxu0 0
  %1698 = vmatprep.subr.bf16.mxu0 0
  %1699 = vmatpush1.bf16.msra.mxu0 0
  %1700 = vmatprep.subr.bf16.mxu0 0
  %1701 = vmatpush1.bf16.msra.mxu0 0
  %1702 = vmatprep.subr.bf16.mxu0 0
  %1703 = vmatpush1.bf16.msra.mxu0 0
  %1704 = vmatprep.subr.bf16.mxu0 0
  %1705 = vmatpush1.bf16.msra.mxu0 0
  %1706 = vmatprep.mubr.bf16.mxu0 0
  %1707 = vmatmul.mubr.bf16.gmra.mrb[0].mxu0 %v1666
  %v1708 = vpop.f32.mrb[0].mxu0
  %v1709 = vadd.f32 %v1656, %v1708
  %v1710 = vpop.f32.mrb[0].mxu0
  %v1711 = vpop.f32.mrb[0].mxu0
  %v1712 = vadd.f32 %v1656, %v1711
  %v1713 = vpop.f32.mrb[0].mxu0
  %1714 = vmatprep.mubr.bf16.mxu0 0
  %1715 = vmatmul.mubr.bf16.gmra.mrb[0].mxu0 %v1669
  %v1716 = vpop.f32.mrb[0].mxu0
  %v1717 = vadd.f32 %v1656, %v1716
  %v1718 = vpop.f32.mrb[0].mxu0
  %v1719 = vpop.f32.mrb[0].mxu0
  %v1720 = vadd.f32 %v1656, %v1719
  %v1721 = vpop.f32.mrb[0].mxu0
  %1722 = vmatprep.mubr.bf16.mxu0 0
  %1723 = vmatmul.mubr.bf16.gmra.mrb[0].mxu0 %v1672
  %v1724 = vpop.f32.mrb[0].mxu0
  %v1725 = vadd.f32 %v1656, %v1724
  %v1726 = vpop.f32.mrb[0].mxu0
  %v1727 = vpop.f32.mrb[0].mxu0
  %v1728 = vadd.f32 %v1656, %v1727
  %v1729 = vpop.f32.mrb[0].mxu0
  %1730 = vdwg.mxu0
  %v1731 = vmul.f32 %v1709, 1.702
  %v1732 = vmul.f32 %v1712, 1.702
  %v1733 = vmul.f32 %v1717, 1.702
  %v1734 = vmul.f32 %v1720, 1.702
  %v1735 = vmul.f32 %v1725, 1.702
  %v1736 = vmul.f32 %v1728, 1.702
  %v1737 = vxor.u32 %v1731, 2147483648
  %v1738 = vxor.u32 %v1732, 2147483648
  %v1739 = vxor.u32 %v1733, 2147483648
  %v1740 = vxor.u32 %v1734, 2147483648
  %v1741 = vxor.u32 %v1735, 2147483648
  %v1742 = vxor.u32 %v1736, 2147483648
  %v1743 = vmul.f32 %v1737, 1.442695
  %v1744 = vpow.pop %v1743
  %v1745 = vmul.f32 %v1738, 1.442695
  %v1746 = vpow.pop %v1745
  %v1747 = vmul.f32 %v1739, 1.442695
  %v1748 = vpow.pop %v1747
  %v1749 = vmul.f32 %v1740, 1.442695
  %v1750 = vpow.pop %v1749
  %v1751 = vmul.f32 %v1741, 1.442695
  %v1752 = vpow.pop %v1751
  %v1753 = vmul.f32 %v1742, 1.442695
  %v1754 = vpow.pop %v1753
  %v1755 = vadd.f32 %v1744, 1.0
  %v1756 = vadd.f32 %v1746, 1.0
  %v1757 = vadd.f32 %v1748, 1.0
  %v1758 = vadd.f32 %v1750, 1.0
  %v1759 = vadd.f32 %v1752, 1.0
  %v1760 = vadd.f32 %v1754, 1.0
  %v1761 = vrcp.pop %v1755
  %v1762 = vmul.f32 1.0, %v1761
  %v1763 = vrcp.pop %v1756
  %v1764 = vmul.f32 1.0, %v1763
  %v1765 = vrcp.pop %v1757
  %v1766 = vmul.f32 1.0, %v1765
  %v1767 = vrcp.pop %v1758
  %v1768 = vmul.f32 1.0, %v1767
  %v1769 = vrcp.pop %v1759
  %v1770 = vmul.f32 1.0, %v1769
  %v1771 = vrcp.pop %v1760
  %v1772 = vmul.f32 1.0, %v1771
  %v1773 = vmul.f32 %v1709, %v1762
  %v1774 = vmul.f32 %v1712, %v1764
  %v1775 = vmul.f32 %v1717, %v1766
  %v1776 = vmul.f32 %v1720, %v1768
  %v1777 = vmul.f32 %v1725, %v1770
  %v1778 = vmul.f32 %v1728, %v1772
  %v1779 = vpack.c.bf16 %v1774, %v1773
  %v1780 = vpack.c.bf16 %v1776, %v1775
  %v1781 = vpack.c.bf16 %v1778, %v1777
  %s1782 = scalar_lea.vmem %s5, 64
  %v1783 = vld [vmem:[%s1782] sm:$0xf]
  %v1784 = vld [vmem:[%s1782 + $0x4] sm:$0xf]
  %v1785 = vld [vmem:[%s1782 + $0x8] sm:$0xf]
  %v1786 = vld [vmem:[%s1782 + $0xc] sm:$0xf]
  %v1787 = vld [vmem:[%s1782 + $0x10] sm:$0xf]
  %v1788 = vld [vmem:[%s1782 + $0x14] sm:$0xf]
  %v1789 = vld [vmem:[%s1782 + $0x18] sm:$0xf]
  %v1790 = vld [vmem:[%s1782 + $0x1c] sm:$0xf]
  %v1791 = vld [vmem:[%s1782 + $0x20] sm:$0xf]
  %v1792 = vld [vmem:[%s1782 + $0x24] sm:$0xf]
  %v1793 = vld [vmem:[%s1782 + $0x28] sm:$0xf]
  %v1794 = vld [vmem:[%s1782 + $0x2c] sm:$0xf]
  %v1795 = vld [vmem:[%s1782 + $0x30] sm:$0xf]
  %v1796 = vld [vmem:[%s1782 + $0x34] sm:$0xf]
  %v1797 = vld [vmem:[%s1782 + $0x38] sm:$0xf]
  %v1798 = vld [vmem:[%s1782 + $0x3c] sm:$0xf]
  %v1815 = vunpack.c.l.b16 %v1783
  %v1816 = vunpack.c.l.b16 %v1784
  %v1817 = vunpack.c.l.b16 %v1785
  %v1818 = vunpack.c.l.b16 %v1786
  %v1819 = vunpack.c.l.b16 %v1787
  %v1820 = vunpack.c.l.b16 %v1788
  %v1821 = vunpack.c.l.b16 %v1789
  %v1822 = vunpack.c.l.b16 %v1790
  %v1823 = vunpack.c.l.b16 %v1791
  %v1824 = vunpack.c.l.b16 %v1792
  %v1825 = vunpack.c.l.b16 %v1793
  %v1826 = vunpack.c.l.b16 %v1794
  %v1827 = vunpack.c.l.b16 %v1795
  %v1828 = vunpack.c.l.b16 %v1796
  %v1829 = vunpack.c.l.b16 %v1797
  %v1830 = vunpack.c.l.b16 %v1798
  %v1831 = vpack.c.b16 %v1816, %v1815
  %v1832 = vpack.c.b16 %v1818, %v1817
  %v1833 = vpack.c.b16 %v1820, %v1819
  %v1834 = vpack.c.b16 %v1822, %v1821
  %v1835 = vpack.c.b16 %v1824, %v1823
  %v1836 = vpack.c.b16 %v1826, %v1825
  %v1837 = vpack.c.b16 %v1828, %v1827
  %v1838 = vpack.c.b16 %v1830, %v1829
  %1847 = vmatprep.subr.bf16.mxu0 0
  %1848 = vmatpush1.bf16.msra.mxu0 %v1831
  %1849 = vmatprep.subr.bf16.mxu0 0
  %1850 = vmatpush1.bf16.msra.mxu0 %v1832
  %1851 = vmatprep.subr.bf16.mxu0 0
  %1852 = vmatpush1.bf16.msra.mxu0 %v1833
  %1853 = vmatprep.subr.bf16.mxu0 0
  %1854 = vmatpush1.bf16.msra.mxu0 %v1834
  %1855 = vmatprep.subr.bf16.mxu0 0
  %1856 = vmatpush1.bf16.msra.mxu0 %v1835
  %1857 = vmatprep.subr.bf16.mxu0 0
  %1858 = vmatpush1.bf16.msra.mxu0 %v1836
  %1859 = vmatprep.subr.bf16.mxu0 0
  %1860 = vmatpush1.bf16.msra.mxu0 %v1837
  %1861 = vmatprep.subr.bf16.mxu0 0
  %1862 = vmatpush1.bf16.msra.mxu0 %v1838
  %1863 = vmatprep.subr.bf16.mxu0 0
  %1864 = vmatpush1.bf16.msra.mxu0 0
  %1865 = vmatprep.subr.bf16.mxu0 0
  %1866 = vmatpush1.bf16.msra.mxu0 0
  %1867 = vmatprep.subr.bf16.mxu0 0
  %1868 = vmatpush1.bf16.msra.mxu0 0
  %1869 = vmatprep.subr.bf16.mxu0 0
  %1870 = vmatpush1.bf16.msra.mxu0 0
  %1871 = vmatprep.subr.bf16.mxu0 0
  %1872 = vmatpush1.bf16.msra.mxu0 0
  %1873 = vmatprep.subr.bf16.mxu0 0
  %1874 = vmatpush1.bf16.msra.mxu0 0
  %1875 = vmatprep.subr.bf16.mxu0 0
  %1876 = vmatpush1.bf16.msra.mxu0 0
  %1877 = vmatprep.subr.bf16.mxu0 0
  %1878 = vmatpush1.bf16.msra.mxu0 0
  %1879 = vmatprep.mubr.bf16.mxu0 0
  %1880 = vmatmul.mubr.bf16.gmra.mrb[0].mxu0 %v1779
  %v1881 = vpop.f32.mrb[0].mxu0
  %v1882 = vadd.f32 0.0, %v1881
  %v1883 = vpop.f32.mrb[0].mxu0
  %v1884 = vpop.f32.mrb[0].mxu0
  %v1885 = vadd.f32 0.0, %v1884
  %v1886 = vpop.f32.mrb[0].mxu0
  %1887 = vmatprep.mubr.bf16.mxu0 0
  %1888 = vmatmul.mubr.bf16.gmra.mrb[0].mxu0 %v1780
  %v1889 = vpop.f32.mrb[0].mxu0
  %v1890 = vadd.f32 0.0, %v1889
  %v1891 = vpop.f32.mrb[0].mxu0
  %v1892 = vpop.f32.mrb[0].mxu0
  %v1893 = vadd.f32 0.0, %v1892
  %v1894 = vpop.f32.mrb[0].mxu0
  %1895 = vmatprep.mubr.bf16.mxu0 0
  %1896 = vmatmul.mubr.bf16.gmra.mrb[0].mxu0 %v1781
  %v1897 = vpop.f32.mrb[0].mxu0
  %v1898 = vadd.f32 0.0, %v1897
  %v1899 = vpop.f32.mrb[0].mxu0
  %v1900 = vpop.f32.mrb[0].mxu0
  %v1901 = vadd.f32 0.0, %v1900
  %v1902 = vpop.f32.mrb[0].mxu0
  %1903 = vdwg.mxu0
  %v1904 = vadd.f32 %v1546, %v1882
  %v1905 = vadd.f32 %v1547, %v1885
  %v1906 = vadd.f32 %v1548, %v1890
  %v1907 = vadd.f32 %v1549, %v1893
  %v1908 = vadd.f32 %v1550, %v1898
  %v1909 = vadd.f32 %v1551, %v1901
  %v1910 = vlaneseq
  %v1911 = vshrl.u32 %v1910, 7
  %v1912 = vsub.s32 7, %v1911
  %v1913 = vrot.slane %v1046, %v1912
  %v1914 = vadd.f32 %v1904, %v1913
  %v1915 = vadd.f32 %v1905, %v1913
  %v1916 = vadd.f32 %v1906, %v1913
  %v1917 = vadd.f32 %v1907, %v1913
  %v1918 = vadd.f32 %v1908, %v1913
  %v1919 = vadd.f32 %v1909, %v1913
  %1920 = vst.msk [vmem:[%s7] sm:$0xff] %vm155, %v1914
  %1921 = vst.msk [vmem:[%s7 + $0x8] sm:$0xff] %vm155, %v1915
  %1922 = vst.msk [vmem:[%s7 + $0x10] sm:$0xff] %vm155, %v1916
  %1923 = vst.msk [vmem:[%s7 + $0x18] sm:$0xff] %vm155, %v1917
  %1924 = vst.msk [vmem:[%s7 + $0x20] sm:$0xff] %vm155, %v1918
  %1925 = vst.msk [vmem:[%s7 + $0x28] sm:$0xff] %vm155, %v1919
  // Predicated region
  $region30: #{clip_vit_forward.1} parent=0 // pred_check
    _
  $region31: #{clip_vit_forward.1} parent=0 // pred_check_branch
    %1927 = sbr.rel (0) target = $region33
  $region32: #{clip_vit_forward.1} parent=0 // pred_region
    _
  $region33: #{clip_vit_forward.1} parent=0 // pred_fallthru
    _
  // Predicated region
  $region34: #{clip_vit_forward.1} parent=0 // pred_check
    _
  $region35: #{clip_vit_forward.1} parent=0 // pred_check_branch
    %1929 = sbr.rel (0) target = $region37
  $region36: #{clip_vit_forward.1} parent=0 // pred_region
    _
  $region37: #{clip_vit_forward.1} parent=0 // pred_fallthru
    _

</llo_original>
